<compile_context>
chip_gen: v7x
topology: tpu7x:2x2x1
jax: 0.10.0
libtpu: 0.0.40
codegen_flags: <defaults>
</compile_context>

<pallas_src>
import functools

import jax
import jax.numpy as jnp
from jax.experimental import pallas as pl
from jax.experimental.pallas import tpu as pltpu


# ----------------------------- fused Pallas kernel --------------------------

def _make_fused_kernel(n_layers, seq_len, hidden_dim):
    """n_layers stacked LSTM over seq_len (wavefront-interleaved), then
    last-timestep classifier (last Linear column + Sigmoid) as a VPU reduction."""
    S = seq_len
    H = hidden_dim

    def kernel(*refs):
        # ---- unpack refs -------------------------------------------------
        idx = 0
        x_ref = refs[idx]; idx += 1                       # (S, TB, E) f32, time-major
        w_ih0_ref = refs[idx]; idx += 1                   # (E, 4H)  bf16
        w_hh0_ref = refs[idx]; idx += 1                   # (H, 4H)  bf16
        b0_ref = refs[idx]; idx += 1                      # (1, 4H)  f32
        fused_refs = []
        for _ in range(n_layers - 1):
            fused_refs.append((refs[idx], refs[idx + 1])) # (2H,4H) bf16, (1,4H) f32
            idx += 2
        h0_ref = refs[idx]; c0_ref = refs[idx + 1]; idx += 2   # (L, TB, H) f32
        wcls_ref = refs[idx]; idx += 1                    # (1, H) f32 (VMEM)
        bcls_ref = refs[idx]; idx += 1                    # (1, 1) f32 (SMEM)
        sig_ref = refs[idx]; hc_ref = refs[idx + 1]       # (TB, 1), (TB, 2*L*H)

        TB = x_ref.shape[1]
        E = x_ref.shape[2]

        # ---- layer-0 hoisted input projection: one MXU matmul, bias folded ----
        x_bf = x_ref[...].astype(jnp.bfloat16).reshape(S * TB, E)
        gates_x0 = (jnp.dot(x_bf, w_ih0_ref[...],
                            preferred_element_type=jnp.float32)
                    + b0_ref[...])                        # (S*TB, 4H) f32

        w_hh0 = w_hh0_ref[...]                            # (H, 4H) bf16
        fused_w = [(w_r[...], b_r[...]) for (w_r, b_r) in fused_refs]

        h = [h0_ref[l] for l in range(n_layers)]          # f32 (TB, H)
        c = [c0_ref[l] for l in range(n_layers)]

        def lstm_step(gates, c_prev):
            # Full-width activations over the (TB, 4H) vreg, then slice.
            # PyTorch gate order: i, f, g, o.
            sig_all = jax.nn.sigmoid(gates)
            tanh_all = jnp.tanh(gates)
            i_g = sig_all[:, 0:H]
            f_g = sig_all[:, H:2 * H]
            g_g = tanh_all[:, 2 * H:3 * H]
            o_g = sig_all[:, 3 * H:4 * H]
            c_new = f_g * c_prev + i_g * g_g
            h_new = o_g * jnp.tanh(c_new)
            return h_new, c_new

        # ---- wavefront-interleaved recurrence (statically unrolled over S) ----
        for t in range(S):
            # Layer 0: hoisted gate slice + recurrent matmul (bf16 MXU, f32 acc).
            g0 = gates_x0[t * TB:(t + 1) * TB, :] + jnp.dot(
                h[0].astype(jnp.bfloat16), w_hh0,
                preferred_element_type=jnp.float32)
            h[0], c[0] = lstm_step(g0, c[0])
            # Layers >= 1: input + recurrent projections fused into one K=2H matmul.
            for l in range(1, n_layers):
                w_f, b_l = fused_w[l - 1]
                inp = jnp.concatenate([h[l - 1], h[l]],
                                      axis=-1).astype(jnp.bfloat16)
                g = jnp.dot(inp, w_f,
                            preferred_element_type=jnp.float32) + b_l
                h[l], c[l] = lstm_step(g, c[l])

        # ---- classifier on the last timestep (== view(B,-1)[:, -1]) ------
        logit = (jnp.sum(h[n_layers - 1] * wcls_ref[...], axis=-1, keepdims=True)
                 + bcls_ref[0, 0])

        # Lane-dense packed (h, c) slab first; width-1 sigmoid written last.
        hc_ref[...] = jnp.concatenate(
            [v for l in range(n_layers) for v in (h[l], c[l])], axis=-1)
        sig_ref[...] = jax.nn.sigmoid(logit)

    return kernel


# ----------------------------- params / wrappers ----------------------------

def init_params(key, vocab_size, embedding_dim, hidden_dim, n_layers, output_size):
    """Deterministic parameter init (uniform, like PyTorch's default LSTM init)."""
    params = {}
    k_emb, key = jax.random.split(key)
    params["embedding"] = jax.random.normal(
        k_emb, (vocab_size, embedding_dim), jnp.float32) * 0.1

    bound = 1.0 / jnp.sqrt(hidden_dim)
    for layer in range(n_layers):
        in_dim = embedding_dim if layer == 0 else hidden_dim
        k1, k2, k3, k4, key = jax.random.split(key, 5)
        # stored pre-transposed: (in, 4H) and (H, 4H); PyTorch gate order i,f,g,o
        params[f"w_ih_{layer}"] = jax.random.uniform(
            k1, (in_dim, 4 * hidden_dim), jnp.float32, -bound, bound)
        params[f"w_hh_{layer}"] = jax.random.uniform(
            k2, (hidden_dim, 4 * hidden_dim), jnp.float32, -bound, bound)
        b_ih = jax.random.uniform(k3, (4 * hidden_dim,), jnp.float32, -bound, bound)
        b_hh = jax.random.uniform(k4, (4 * hidden_dim,), jnp.float32, -bound, bound)
        params[f"b_{layer}"] = (b_ih + b_hh).reshape(1, 4 * hidden_dim)

    k5, k6, key = jax.random.split(key, 3)
    params["w_cls"] = jax.random.uniform(
        k5, (hidden_dim, output_size), jnp.float32, -bound, bound)
    params["b_cls"] = jax.random.uniform(
        k6, (1, output_size), jnp.float32, -bound, bound)
    return params


def init_hidden(n_layers, batch_size, hidden_dim):
    z = jnp.zeros((n_layers, batch_size, hidden_dim), jnp.float32)
    return (z, z)


@functools.partial(jax.jit, static_argnames=("n_layers", "hidden_dim"))
def forward(x_ids, hidden, params, *, n_layers, hidden_dim):
    """Mirror of Network.forward: returns (sig_out[:, -1], new_hidden)."""
    B, S = x_ids.shape
    H = hidden_dim
    h0_all, c0_all = hidden

    # Embedding lookup (gather) — glue, stays in plain JAX.
    embeds = jnp.take(params["embedding"], x_ids, axis=0)        # (B, S, E)
    x_tm = jnp.transpose(embeds, (1, 0, 2))                      # (S, B, E)
    E = x_tm.shape[-1]

    # Pad batch to a sublane multiple of 8 and to a multiple of the batch tile.
    B_pad = ((B + 7) // 8) * 8
    TB = min(B_pad, 256)
    B_pad = ((B_pad + TB - 1) // TB) * TB
    pad = B_pad - B
    if pad:
        x_tm = jnp.pad(x_tm, ((0, 0), (0, pad), (0, 0)))
        h0_all = jnp.pad(h0_all, ((0, 0), (0, pad), (0, 0)))
        c0_all = jnp.pad(c0_all, ((0, 0), (0, pad), (0, 0)))

    # MXU operands in bf16 (f32 accumulation / f32 elementwise inside the kernel).
    w_ih0 = params["w_ih_0"].astype(jnp.bfloat16)
    w_hh0 = params["w_hh_0"].astype(jnp.bfloat16)
    b0 = params["b_0"]

    # Only the last Linear column / bias is ever observed by view(B,-1)[:, -1].
    w_cls_row = params["w_cls"][:, -1].reshape(1, H)
    b_cls_last = params["b_cls"][:, -1].reshape(1, 1)

    args = [x_tm, w_ih0, w_hh0, b0]
    in_specs = [
        pl.BlockSpec((S, TB, E), lambda i: (0, i, 0)),
        pl.BlockSpec((E, 4 * H), lambda i: (0, 0)),
        pl.BlockSpec((H, 4 * H), lambda i: (0, 0)),
        pl.BlockSpec((1, 4 * H), lambda i: (0, 0)),
    ]
    for layer in range(1, n_layers):
        # Row-stacked [W_ih; W_hh]: layer-l input projection fused into the
        # recurrent matmul (one K=2H MXU push per step).
        w_fused = jnp.concatenate(
            [params[f"w_ih_{layer}"], params[f"w_hh_{layer}"]],
            axis=0).astype(jnp.bfloat16)
        args += [w_fused, params[f"b_{layer}"]]
        in_specs += [pl.BlockSpec((2 * H, 4 * H), lambda i: (0, 0)),
                     pl.BlockSpec((1, 4 * H), lambda i: (0, 0))]
    args += [h0_all, c0_all, w_cls_row, b_cls_last]
    in_specs += [
        pl.BlockSpec((n_layers, TB, H), lambda i: (0, i, 0)),
        pl.BlockSpec((n_layers, TB, H), lambda i: (0, i, 0)),
        pl.BlockSpec((1, H), lambda i: (0, 0)),
        pl.BlockSpec(memory_space=pltpu.MemorySpace.SMEM),   # (1,1) scalar bias
    ]

    out_shapes = (
        jax.ShapeDtypeStruct((B_pad, 1), jnp.float32),
        jax.ShapeDtypeStruct((B_pad, 2 * n_layers * H), jnp.float32),
    )
    out_specs = (
        pl.BlockSpec((TB, 1), lambda i: (i, 0)),
        pl.BlockSpec((TB, 2 * n_layers * H), lambda i: (i, 0)),
    )

    kernel = _make_fused_kernel(n_layers, S, H)
    sig, hc = pl.pallas_call(
        kernel,
        grid=(B_pad // TB,),
        out_shape=out_shapes,
        in_specs=in_specs,
        out_specs=out_specs,
        compiler_params=pltpu.CompilerParams(
            dimension_semantics=("parallel",)),
    )(*args)

    sig_out = sig[:B, 0]                                          # (B,)
    hc = hc[:B].reshape(B, n_layers, 2, H)
    hT = jnp.transpose(hc[:, :, 0, :], (1, 0, 2))                 # (L, B, H)
    cT = jnp.transpose(hc[:, :, 1, :], (1, 0, 2))
    return sig_out, (hT, cT)


# ----------------------------- main -----------------------------------------

if __name__ == "__main__":
    vocab_size = 50
    output_size = 1
    embedding_dim = 32
    hidden_dim = 32
    n_layers = 2
    batch_size = 2
    seq_len = 8

    key = jax.random.PRNGKey(0)
    k_params, k_x = jax.random.split(key)

    params = init_params(k_params, vocab_size, embedding_dim,
                         hidden_dim, n_layers, output_size)
    x_ids = jax.random.randint(k_x, (batch_size, seq_len), 0, vocab_size,
                               dtype=jnp.int32)
    hidden = init_hidden(n_layers, batch_size, hidden_dim)

    sig_out, new_hidden = forward(x_ids, hidden, params,
                                  n_layers=n_layers, hidden_dim=hidden_dim)
    jax.block_until_ready((sig_out, new_hidden))

    assert sig_out.shape == (batch_size,)
    assert new_hidden[0].shape == (n_layers, batch_size, hidden_dim)
    assert new_hidden[1].shape == (n_layers, batch_size, hidden_dim)
    assert bool(jnp.all((sig_out >= 0.0) & (sig_out <= 1.0)))
    assert bool(jnp.all(jnp.isfinite(new_hidden[0])))
    assert bool(jnp.all(jnp.isfinite(new_hidden[1])))
    print("KERNEL_OK")
</pallas_src>

<mosaic_0001>
module attributes {stable_mosaic.version = 11 : i64} {
  func.func @kernel(%arg0: i32, %arg1: memref<8x8x32xf32, #tpu.memory_space<vmem>>, %arg2: memref<32x128xbf16, #tpu.memory_space<vmem>>, %arg3: memref<32x128xbf16, #tpu.memory_space<vmem>>, %arg4: memref<1x128xf32, #tpu.memory_space<vmem>>, %arg5: memref<64x128xbf16, #tpu.memory_space<vmem>>, %arg6: memref<1x128xf32, #tpu.memory_space<vmem>>, %arg7: memref<2x8x32xf32, #tpu.memory_space<vmem>>, %arg8: memref<2x8x32xf32, #tpu.memory_space<vmem>>, %arg9: memref<1x32xf32, #tpu.memory_space<vmem>>, %arg10: memref<1x1xf32, #tpu.memory_space<smem>>, %arg11: memref<8x1xf32, #tpu.memory_space<vmem>>, %arg12: memref<8x128xf32, #tpu.memory_space<vmem>>) attributes {dimension_semantics = [#tpu.dimension_semantics<parallel>], iteration_bounds = array<i64: 1>, scalar_prefetch = 0 : i64, scratch_operands = 0 : i64, tpu.core_type = #tpu.core_type<tc>, window_params = [{transform_indices = @transform_0, window_bounds = array<i64: 8, 8, 32>}, {pipeline_mode = #tpu.pipeline_mode<synchronous>, transform_indices = @transform_1, window_bounds = array<i64: 32, 128>}, {pipeline_mode = #tpu.pipeline_mode<synchronous>, transform_indices = @transform_2, window_bounds = array<i64: 32, 128>}, {pipeline_mode = #tpu.pipeline_mode<synchronous>, transform_indices = @transform_3, window_bounds = array<i64: 1, 128>}, {pipeline_mode = #tpu.pipeline_mode<synchronous>, transform_indices = @transform_4, window_bounds = array<i64: 64, 128>}, {pipeline_mode = #tpu.pipeline_mode<synchronous>, transform_indices = @transform_5, window_bounds = array<i64: 1, 128>}, {transform_indices = @transform_6, window_bounds = array<i64: 2, 8, 32>}, {transform_indices = @transform_7, window_bounds = array<i64: 2, 8, 32>}, {pipeline_mode = #tpu.pipeline_mode<synchronous>, transform_indices = @transform_8, window_bounds = array<i64: 1, 32>}, {transform_indices = @transform_9, window_bounds = array<i64: 1, 1>}, {transform_indices = @transform_10, window_bounds = array<i64: 8, 1>}, {transform_indices = @transform_11, window_bounds = array<i64: 8, 128>}]} {
    %c0 = arith.constant 0 : index
    %c0_0 = arith.constant 0 : index
    %c0_1 = arith.constant 0 : index
    %0 = vector.load %arg1[%c0, %c0_0, %c0_1] : memref<8x8x32xf32, #tpu.memory_space<vmem>>, vector<8x8x32xf32>
    %1 = arith.truncf %0 : vector<8x8x32xf32> to vector<8x8x32xbf16>
    %2 = vector.shape_cast %1 : vector<8x8x32xbf16> to vector<64x32xbf16>
    %c0_2 = arith.constant 0 : index
    %c0_3 = arith.constant 0 : index
    %3 = vector.load %arg2[%c0_2, %c0_3] : memref<32x128xbf16, #tpu.memory_space<vmem>>, vector<32x128xbf16>
    %cst = arith.constant dense<0.000000e+00> : vector<64x128xf32>
    %4 = tpu.matmul %2, %3, %cst {dimension_numbers = #tpu.dot_dimension_numbers<[1], [0], [0], [1], [0, 0, 1, 1], [], []>} : vector<64x32xbf16>, vector<32x128xbf16>, vector<64x128xf32> -> vector<64x128xf32>
    %c0_4 = arith.constant 0 : index
    %c0_5 = arith.constant 0 : index
    %5 = vector.load %arg4[%c0_4, %c0_5] : memref<1x128xf32, #tpu.memory_space<vmem>>, vector<1x128xf32>
    %6 = vector.broadcast %5 : vector<1x128xf32> to vector<64x128xf32>
    %7 = arith.addf %4, %6 : vector<64x128xf32>
    %c0_6 = arith.constant 0 : index
    %c0_7 = arith.constant 0 : index
    %8 = vector.load %arg3[%c0_6, %c0_7] : memref<32x128xbf16, #tpu.memory_space<vmem>>, vector<32x128xbf16>
    %c0_8 = arith.constant 0 : index
    %c0_9 = arith.constant 0 : index
    %9 = vector.load %arg5[%c0_8, %c0_9] : memref<64x128xbf16, #tpu.memory_space<vmem>>, vector<64x128xbf16>
    %c0_10 = arith.constant 0 : index
    %c0_11 = arith.constant 0 : index
    %10 = vector.load %arg6[%c0_10, %c0_11] : memref<1x128xf32, #tpu.memory_space<vmem>>, vector<1x128xf32>
    %c0_12 = arith.constant 0 : index
    %c0_13 = arith.constant 0 : index
    %c0_14 = arith.constant 0 : index
    %11 = vector.load %arg7[%c0_12, %c0_13, %c0_14] : memref<2x8x32xf32, #tpu.memory_space<vmem>>, vector<1x8x32xf32>
    %12 = vector.shape_cast %11 : vector<1x8x32xf32> to vector<8x32xf32>
    %c1 = arith.constant 1 : index
    %c0_15 = arith.constant 0 : index
    %c0_16 = arith.constant 0 : index
    %13 = vector.load %arg7[%c1, %c0_15, %c0_16] : memref<2x8x32xf32, #tpu.memory_space<vmem>>, vector<1x8x32xf32>
    %14 = vector.shape_cast %13 : vector<1x8x32xf32> to vector<8x32xf32>
    %c0_17 = arith.constant 0 : index
    %c0_18 = arith.constant 0 : index
    %c0_19 = arith.constant 0 : index
    %15 = vector.load %arg8[%c0_17, %c0_18, %c0_19] : memref<2x8x32xf32, #tpu.memory_space<vmem>>, vector<1x8x32xf32>
    %16 = vector.shape_cast %15 : vector<1x8x32xf32> to vector<8x32xf32>
    %c1_20 = arith.constant 1 : index
    %c0_21 = arith.constant 0 : index
    %c0_22 = arith.constant 0 : index
    %17 = vector.load %arg8[%c1_20, %c0_21, %c0_22] : memref<2x8x32xf32, #tpu.memory_space<vmem>>, vector<1x8x32xf32>
    %18 = vector.shape_cast %17 : vector<1x8x32xf32> to vector<8x32xf32>
    %19 = vector.extract_strided_slice %7 {offsets = [0, 0], sizes = [8, 128], strides = [1, 1]} : vector<64x128xf32> to vector<8x128xf32>
    %20 = arith.truncf %12 : vector<8x32xf32> to vector<8x32xbf16>
    %cst_23 = arith.constant dense<0.000000e+00> : vector<8x128xf32>
    %21 = tpu.matmul %20, %8, %cst_23 {dimension_numbers = #tpu.dot_dimension_numbers<[1], [0], [0], [1], [0, 0, 1, 1], [], []>} : vector<8x32xbf16>, vector<32x128xbf16>, vector<8x128xf32> -> vector<8x128xf32>
    %22 = arith.addf %19, %21 : vector<8x128xf32>
    %23 = arith.negf %22 : vector<8x128xf32>
    %24 = math.exp %23 : vector<8x128xf32>
    %cst_24 = arith.constant 1.000000e+00 : f32
    %25 = vector.broadcast %cst_24 : f32 to vector<8x128xf32>
    %26 = arith.addf %25, %24 : vector<8x128xf32>
    %27 = arith.divf %25, %26 : vector<8x128xf32>
    %28 = math.tanh %22 : vector<8x128xf32>
    %29 = vector.extract_strided_slice %27 {offsets = [0, 0], sizes = [8, 32], strides = [1, 1]} : vector<8x128xf32> to vector<8x32xf32>
    %30 = vector.extract_strided_slice %27 {offsets = [0, 32], sizes = [8, 32], strides = [1, 1]} : vector<8x128xf32> to vector<8x32xf32>
    %31 = vector.extract_strided_slice %28 {offsets = [0, 64], sizes = [8, 32], strides = [1, 1]} : vector<8x128xf32> to vector<8x32xf32>
    %32 = vector.extract_strided_slice %27 {offsets = [0, 96], sizes = [8, 32], strides = [1, 1]} : vector<8x128xf32> to vector<8x32xf32>
    %33 = arith.mulf %30, %16 : vector<8x32xf32>
    %34 = arith.mulf %29, %31 : vector<8x32xf32>
    %35 = arith.addf %33, %34 : vector<8x32xf32>
    %36 = math.tanh %35 : vector<8x32xf32>
    %37 = arith.mulf %32, %36 : vector<8x32xf32>
    %38 = tpu.concatenate %37, %14 in 1 : vector<8x32xf32>, vector<8x32xf32> -> vector<8x64xf32>
    %39 = arith.truncf %38 : vector<8x64xf32> to vector<8x64xbf16>
    %cst_25 = arith.constant dense<0.000000e+00> : vector<8x128xf32>
    %40 = tpu.matmul %39, %9, %cst_25 {dimension_numbers = #tpu.dot_dimension_numbers<[1], [0], [0], [1], [0, 0, 1, 1], [], []>} : vector<8x64xbf16>, vector<64x128xbf16>, vector<8x128xf32> -> vector<8x128xf32>
    %41 = vector.broadcast %10 : vector<1x128xf32> to vector<8x128xf32>
    %42 = arith.addf %40, %41 : vector<8x128xf32>
    %43 = arith.negf %42 : vector<8x128xf32>
    %44 = math.exp %43 : vector<8x128xf32>
    %cst_26 = arith.constant 1.000000e+00 : f32
    %45 = vector.broadcast %cst_26 : f32 to vector<8x128xf32>
    %46 = arith.addf %45, %44 : vector<8x128xf32>
    %47 = arith.divf %45, %46 : vector<8x128xf32>
    %48 = math.tanh %42 : vector<8x128xf32>
    %49 = vector.extract_strided_slice %47 {offsets = [0, 0], sizes = [8, 32], strides = [1, 1]} : vector<8x128xf32> to vector<8x32xf32>
    %50 = vector.extract_strided_slice %47 {offsets = [0, 32], sizes = [8, 32], strides = [1, 1]} : vector<8x128xf32> to vector<8x32xf32>
    %51 = vector.extract_strided_slice %48 {offsets = [0, 64], sizes = [8, 32], strides = [1, 1]} : vector<8x128xf32> to vector<8x32xf32>
    %52 = vector.extract_strided_slice %47 {offsets = [0, 96], sizes = [8, 32], strides = [1, 1]} : vector<8x128xf32> to vector<8x32xf32>
    %53 = arith.mulf %50, %18 : vector<8x32xf32>
    %54 = arith.mulf %49, %51 : vector<8x32xf32>
    %55 = arith.addf %53, %54 : vector<8x32xf32>
    %56 = math.tanh %55 : vector<8x32xf32>
    %57 = arith.mulf %52, %56 : vector<8x32xf32>
    %58 = vector.extract_strided_slice %7 {offsets = [8, 0], sizes = [8, 128], strides = [1, 1]} : vector<64x128xf32> to vector<8x128xf32>
    %59 = arith.truncf %37 : vector<8x32xf32> to vector<8x32xbf16>
    %cst_27 = arith.constant dense<0.000000e+00> : vector<8x128xf32>
    %60 = tpu.matmul %59, %8, %cst_27 {dimension_numbers = #tpu.dot_dimension_numbers<[1], [0], [0], [1], [0, 0, 1, 1], [], []>} : vector<8x32xbf16>, vector<32x128xbf16>, vector<8x128xf32> -> vector<8x128xf32>
    %61 = arith.addf %58, %60 : vector<8x128xf32>
    %62 = arith.negf %61 : vector<8x128xf32>
    %63 = math.exp %62 : vector<8x128xf32>
    %cst_28 = arith.constant 1.000000e+00 : f32
    %64 = vector.broadcast %cst_28 : f32 to vector<8x128xf32>
    %65 = arith.addf %64, %63 : vector<8x128xf32>
    %66 = arith.divf %64, %65 : vector<8x128xf32>
    %67 = math.tanh %61 : vector<8x128xf32>
    %68 = vector.extract_strided_slice %66 {offsets = [0, 0], sizes = [8, 32], strides = [1, 1]} : vector<8x128xf32> to vector<8x32xf32>
    %69 = vector.extract_strided_slice %66 {offsets = [0, 32], sizes = [8, 32], strides = [1, 1]} : vector<8x128xf32> to vector<8x32xf32>
    %70 = vector.extract_strided_slice %67 {offsets = [0, 64], sizes = [8, 32], strides = [1, 1]} : vector<8x128xf32> to vector<8x32xf32>
    %71 = vector.extract_strided_slice %66 {offsets = [0, 96], sizes = [8, 32], strides = [1, 1]} : vector<8x128xf32> to vector<8x32xf32>
    %72 = arith.mulf %69, %35 : vector<8x32xf32>
    %73 = arith.mulf %68, %70 : vector<8x32xf32>
    %74 = arith.addf %72, %73 : vector<8x32xf32>
    %75 = math.tanh %74 : vector<8x32xf32>
    %76 = arith.mulf %71, %75 : vector<8x32xf32>
    %77 = tpu.concatenate %76, %57 in 1 : vector<8x32xf32>, vector<8x32xf32> -> vector<8x64xf32>
    %78 = arith.truncf %77 : vector<8x64xf32> to vector<8x64xbf16>
    %cst_29 = arith.constant dense<0.000000e+00> : vector<8x128xf32>
    %79 = tpu.matmul %78, %9, %cst_29 {dimension_numbers = #tpu.dot_dimension_numbers<[1], [0], [0], [1], [0, 0, 1, 1], [], []>} : vector<8x64xbf16>, vector<64x128xbf16>, vector<8x128xf32> -> vector<8x128xf32>
    %80 = vector.broadcast %10 : vector<1x128xf32> to vector<8x128xf32>
    %81 = arith.addf %79, %80 : vector<8x128xf32>
    %82 = arith.negf %81 : vector<8x128xf32>
    %83 = math.exp %82 : vector<8x128xf32>
    %cst_30 = arith.constant 1.000000e+00 : f32
    %84 = vector.broadcast %cst_30 : f32 to vector<8x128xf32>
    %85 = arith.addf %84, %83 : vector<8x128xf32>
    %86 = arith.divf %84, %85 : vector<8x128xf32>
    %87 = math.tanh %81 : vector<8x128xf32>
    %88 = vector.extract_strided_slice %86 {offsets = [0, 0], sizes = [8, 32], strides = [1, 1]} : vector<8x128xf32> to vector<8x32xf32>
    %89 = vector.extract_strided_slice %86 {offsets = [0, 32], sizes = [8, 32], strides = [1, 1]} : vector<8x128xf32> to vector<8x32xf32>
    %90 = vector.extract_strided_slice %87 {offsets = [0, 64], sizes = [8, 32], strides = [1, 1]} : vector<8x128xf32> to vector<8x32xf32>
    %91 = vector.extract_strided_slice %86 {offsets = [0, 96], sizes = [8, 32], strides = [1, 1]} : vector<8x128xf32> to vector<8x32xf32>
    %92 = arith.mulf %89, %55 : vector<8x32xf32>
    %93 = arith.mulf %88, %90 : vector<8x32xf32>
    %94 = arith.addf %92, %93 : vector<8x32xf32>
    %95 = math.tanh %94 : vector<8x32xf32>
    %96 = arith.mulf %91, %95 : vector<8x32xf32>
    %97 = vector.extract_strided_slice %7 {offsets = [16, 0], sizes = [8, 128], strides = [1, 1]} : vector<64x128xf32> to vector<8x128xf32>
    %98 = arith.truncf %76 : vector<8x32xf32> to vector<8x32xbf16>
    %cst_31 = arith.constant dense<0.000000e+00> : vector<8x128xf32>
    %99 = tpu.matmul %98, %8, %cst_31 {dimension_numbers = #tpu.dot_dimension_numbers<[1], [0], [0], [1], [0, 0, 1, 1], [], []>} : vector<8x32xbf16>, vector<32x128xbf16>, vector<8x128xf32> -> vector<8x128xf32>
    %100 = arith.addf %97, %99 : vector<8x128xf32>
    %101 = arith.negf %100 : vector<8x128xf32>
    %102 = math.exp %101 : vector<8x128xf32>
    %cst_32 = arith.constant 1.000000e+00 : f32
    %103 = vector.broadcast %cst_32 : f32 to vector<8x128xf32>
    %104 = arith.addf %103, %102 : vector<8x128xf32>
    %105 = arith.divf %103, %104 : vector<8x128xf32>
    %106 = math.tanh %100 : vector<8x128xf32>
    %107 = vector.extract_strided_slice %105 {offsets = [0, 0], sizes = [8, 32], strides = [1, 1]} : vector<8x128xf32> to vector<8x32xf32>
    %108 = vector.extract_strided_slice %105 {offsets = [0, 32], sizes = [8, 32], strides = [1, 1]} : vector<8x128xf32> to vector<8x32xf32>
    %109 = vector.extract_strided_slice %106 {offsets = [0, 64], sizes = [8, 32], strides = [1, 1]} : vector<8x128xf32> to vector<8x32xf32>
    %110 = vector.extract_strided_slice %105 {offsets = [0, 96], sizes = [8, 32], strides = [1, 1]} : vector<8x128xf32> to vector<8x32xf32>
    %111 = arith.mulf %108, %74 : vector<8x32xf32>
    %112 = arith.mulf %107, %109 : vector<8x32xf32>
    %113 = arith.addf %111, %112 : vector<8x32xf32>
    %114 = math.tanh %113 : vector<8x32xf32>
    %115 = arith.mulf %110, %114 : vector<8x32xf32>
    %116 = tpu.concatenate %115, %96 in 1 : vector<8x32xf32>, vector<8x32xf32> -> vector<8x64xf32>
    %117 = arith.truncf %116 : vector<8x64xf32> to vector<8x64xbf16>
    %cst_33 = arith.constant dense<0.000000e+00> : vector<8x128xf32>
    %118 = tpu.matmul %117, %9, %cst_33 {dimension_numbers = #tpu.dot_dimension_numbers<[1], [0], [0], [1], [0, 0, 1, 1], [], []>} : vector<8x64xbf16>, vector<64x128xbf16>, vector<8x128xf32> -> vector<8x128xf32>
    %119 = vector.broadcast %10 : vector<1x128xf32> to vector<8x128xf32>
    %120 = arith.addf %118, %119 : vector<8x128xf32>
    %121 = arith.negf %120 : vector<8x128xf32>
    %122 = math.exp %121 : vector<8x128xf32>
    %cst_34 = arith.constant 1.000000e+00 : f32
    %123 = vector.broadcast %cst_34 : f32 to vector<8x128xf32>
    %124 = arith.addf %123, %122 : vector<8x128xf32>
    %125 = arith.divf %123, %124 : vector<8x128xf32>
    %126 = math.tanh %120 : vector<8x128xf32>
    %127 = vector.extract_strided_slice %125 {offsets = [0, 0], sizes = [8, 32], strides = [1, 1]} : vector<8x128xf32> to vector<8x32xf32>
    %128 = vector.extract_strided_slice %125 {offsets = [0, 32], sizes = [8, 32], strides = [1, 1]} : vector<8x128xf32> to vector<8x32xf32>
    %129 = vector.extract_strided_slice %126 {offsets = [0, 64], sizes = [8, 32], strides = [1, 1]} : vector<8x128xf32> to vector<8x32xf32>
    %130 = vector.extract_strided_slice %125 {offsets = [0, 96], sizes = [8, 32], strides = [1, 1]} : vector<8x128xf32> to vector<8x32xf32>
    %131 = arith.mulf %128, %94 : vector<8x32xf32>
    %132 = arith.mulf %127, %129 : vector<8x32xf32>
    %133 = arith.addf %131, %132 : vector<8x32xf32>
    %134 = math.tanh %133 : vector<8x32xf32>
    %135 = arith.mulf %130, %134 : vector<8x32xf32>
    %136 = vector.extract_strided_slice %7 {offsets = [24, 0], sizes = [8, 128], strides = [1, 1]} : vector<64x128xf32> to vector<8x128xf32>
    %137 = arith.truncf %115 : vector<8x32xf32> to vector<8x32xbf16>
    %cst_35 = arith.constant dense<0.000000e+00> : vector<8x128xf32>
    %138 = tpu.matmul %137, %8, %cst_35 {dimension_numbers = #tpu.dot_dimension_numbers<[1], [0], [0], [1], [0, 0, 1, 1], [], []>} : vector<8x32xbf16>, vector<32x128xbf16>, vector<8x128xf32> -> vector<8x128xf32>
    %139 = arith.addf %136, %138 : vector<8x128xf32>
    %140 = arith.negf %139 : vector<8x128xf32>
    %141 = math.exp %140 : vector<8x128xf32>
    %cst_36 = arith.constant 1.000000e+00 : f32
    %142 = vector.broadcast %cst_36 : f32 to vector<8x128xf32>
    %143 = arith.addf %142, %141 : vector<8x128xf32>
    %144 = arith.divf %142, %143 : vector<8x128xf32>
    %145 = math.tanh %139 : vector<8x128xf32>
    %146 = vector.extract_strided_slice %144 {offsets = [0, 0], sizes = [8, 32], strides = [1, 1]} : vector<8x128xf32> to vector<8x32xf32>
    %147 = vector.extract_strided_slice %144 {offsets = [0, 32], sizes = [8, 32], strides = [1, 1]} : vector<8x128xf32> to vector<8x32xf32>
    %148 = vector.extract_strided_slice %145 {offsets = [0, 64], sizes = [8, 32], strides = [1, 1]} : vector<8x128xf32> to vector<8x32xf32>
    %149 = vector.extract_strided_slice %144 {offsets = [0, 96], sizes = [8, 32], strides = [1, 1]} : vector<8x128xf32> to vector<8x32xf32>
    %150 = arith.mulf %147, %113 : vector<8x32xf32>
    %151 = arith.mulf %146, %148 : vector<8x32xf32>
    %152 = arith.addf %150, %151 : vector<8x32xf32>
    %153 = math.tanh %152 : vector<8x32xf32>
    %154 = arith.mulf %149, %153 : vector<8x32xf32>
    %155 = tpu.concatenate %154, %135 in 1 : vector<8x32xf32>, vector<8x32xf32> -> vector<8x64xf32>
    %156 = arith.truncf %155 : vector<8x64xf32> to vector<8x64xbf16>
    %cst_37 = arith.constant dense<0.000000e+00> : vector<8x128xf32>
    %157 = tpu.matmul %156, %9, %cst_37 {dimension_numbers = #tpu.dot_dimension_numbers<[1], [0], [0], [1], [0, 0, 1, 1], [], []>} : vector<8x64xbf16>, vector<64x128xbf16>, vector<8x128xf32> -> vector<8x128xf32>
    %158 = vector.broadcast %10 : vector<1x128xf32> to vector<8x128xf32>
    %159 = arith.addf %157, %158 : vector<8x128xf32>
    %160 = arith.negf %159 : vector<8x128xf32>
    %161 = math.exp %160 : vector<8x128xf32>
    %cst_38 = arith.constant 1.000000e+00 : f32
    %162 = vector.broadcast %cst_38 : f32 to vector<8x128xf32>
    %163 = arith.addf %162, %161 : vector<8x128xf32>
    %164 = arith.divf %162, %163 : vector<8x128xf32>
    %165 = math.tanh %159 : vector<8x128xf32>
    %166 = vector.extract_strided_slice %164 {offsets = [0, 0], sizes = [8, 32], strides = [1, 1]} : vector<8x128xf32> to vector<8x32xf32>
    %167 = vector.extract_strided_slice %164 {offsets = [0, 32], sizes = [8, 32], strides = [1, 1]} : vector<8x128xf32> to vector<8x32xf32>
    %168 = vector.extract_strided_slice %165 {offsets = [0, 64], sizes = [8, 32], strides = [1, 1]} : vector<8x128xf32> to vector<8x32xf32>
    %169 = vector.extract_strided_slice %164 {offsets = [0, 96], sizes = [8, 32], strides = [1, 1]} : vector<8x128xf32> to vector<8x32xf32>
    %170 = arith.mulf %167, %133 : vector<8x32xf32>
    %171 = arith.mulf %166, %168 : vector<8x32xf32>
    %172 = arith.addf %170, %171 : vector<8x32xf32>
    %173 = math.tanh %172 : vector<8x32xf32>
    %174 = arith.mulf %169, %173 : vector<8x32xf32>
    %175 = vector.extract_strided_slice %7 {offsets = [32, 0], sizes = [8, 128], strides = [1, 1]} : vector<64x128xf32> to vector<8x128xf32>
    %176 = arith.truncf %154 : vector<8x32xf32> to vector<8x32xbf16>
    %cst_39 = arith.constant dense<0.000000e+00> : vector<8x128xf32>
    %177 = tpu.matmul %176, %8, %cst_39 {dimension_numbers = #tpu.dot_dimension_numbers<[1], [0], [0], [1], [0, 0, 1, 1], [], []>} : vector<8x32xbf16>, vector<32x128xbf16>, vector<8x128xf32> -> vector<8x128xf32>
    %178 = arith.addf %175, %177 : vector<8x128xf32>
    %179 = arith.negf %178 : vector<8x128xf32>
    %180 = math.exp %179 : vector<8x128xf32>
    %cst_40 = arith.constant 1.000000e+00 : f32
    %181 = vector.broadcast %cst_40 : f32 to vector<8x128xf32>
    %182 = arith.addf %181, %180 : vector<8x128xf32>
    %183 = arith.divf %181, %182 : vector<8x128xf32>
    %184 = math.tanh %178 : vector<8x128xf32>
    %185 = vector.extract_strided_slice %183 {offsets = [0, 0], sizes = [8, 32], strides = [1, 1]} : vector<8x128xf32> to vector<8x32xf32>
    %186 = vector.extract_strided_slice %183 {offsets = [0, 32], sizes = [8, 32], strides = [1, 1]} : vector<8x128xf32> to vector<8x32xf32>
    %187 = vector.extract_strided_slice %184 {offsets = [0, 64], sizes = [8, 32], strides = [1, 1]} : vector<8x128xf32> to vector<8x32xf32>
    %188 = vector.extract_strided_slice %183 {offsets = [0, 96], sizes = [8, 32], strides = [1, 1]} : vector<8x128xf32> to vector<8x32xf32>
    %189 = arith.mulf %186, %152 : vector<8x32xf32>
    %190 = arith.mulf %185, %187 : vector<8x32xf32>
    %191 = arith.addf %189, %190 : vector<8x32xf32>
    %192 = math.tanh %191 : vector<8x32xf32>
    %193 = arith.mulf %188, %192 : vector<8x32xf32>
    %194 = tpu.concatenate %193, %174 in 1 : vector<8x32xf32>, vector<8x32xf32> -> vector<8x64xf32>
    %195 = arith.truncf %194 : vector<8x64xf32> to vector<8x64xbf16>
    %cst_41 = arith.constant dense<0.000000e+00> : vector<8x128xf32>
    %196 = tpu.matmul %195, %9, %cst_41 {dimension_numbers = #tpu.dot_dimension_numbers<[1], [0], [0], [1], [0, 0, 1, 1], [], []>} : vector<8x64xbf16>, vector<64x128xbf16>, vector<8x128xf32> -> vector<8x128xf32>
    %197 = vector.broadcast %10 : vector<1x128xf32> to vector<8x128xf32>
    %198 = arith.addf %196, %197 : vector<8x128xf32>
    %199 = arith.negf %198 : vector<8x128xf32>
    %200 = math.exp %199 : vector<8x128xf32>
    %cst_42 = arith.constant 1.000000e+00 : f32
    %201 = vector.broadcast %cst_42 : f32 to vector<8x128xf32>
    %202 = arith.addf %201, %200 : vector<8x128xf32>
    %203 = arith.divf %201, %202 : vector<8x128xf32>
    %204 = math.tanh %198 : vector<8x128xf32>
    %205 = vector.extract_strided_slice %203 {offsets = [0, 0], sizes = [8, 32], strides = [1, 1]} : vector<8x128xf32> to vector<8x32xf32>
    %206 = vector.extract_strided_slice %203 {offsets = [0, 32], sizes = [8, 32], strides = [1, 1]} : vector<8x128xf32> to vector<8x32xf32>
    %207 = vector.extract_strided_slice %204 {offsets = [0, 64], sizes = [8, 32], strides = [1, 1]} : vector<8x128xf32> to vector<8x32xf32>
    %208 = vector.extract_strided_slice %203 {offsets = [0, 96], sizes = [8, 32], strides = [1, 1]} : vector<8x128xf32> to vector<8x32xf32>
    %209 = arith.mulf %206, %172 : vector<8x32xf32>
    %210 = arith.mulf %205, %207 : vector<8x32xf32>
    %211 = arith.addf %209, %210 : vector<8x32xf32>
    %212 = math.tanh %211 : vector<8x32xf32>
    %213 = arith.mulf %208, %212 : vector<8x32xf32>
    %214 = vector.extract_strided_slice %7 {offsets = [40, 0], sizes = [8, 128], strides = [1, 1]} : vector<64x128xf32> to vector<8x128xf32>
    %215 = arith.truncf %193 : vector<8x32xf32> to vector<8x32xbf16>
    %cst_43 = arith.constant dense<0.000000e+00> : vector<8x128xf32>
    %216 = tpu.matmul %215, %8, %cst_43 {dimension_numbers = #tpu.dot_dimension_numbers<[1], [0], [0], [1], [0, 0, 1, 1], [], []>} : vector<8x32xbf16>, vector<32x128xbf16>, vector<8x128xf32> -> vector<8x128xf32>
    %217 = arith.addf %214, %216 : vector<8x128xf32>
    %218 = arith.negf %217 : vector<8x128xf32>
    %219 = math.exp %218 : vector<8x128xf32>
    %cst_44 = arith.constant 1.000000e+00 : f32
    %220 = vector.broadcast %cst_44 : f32 to vector<8x128xf32>
    %221 = arith.addf %220, %219 : vector<8x128xf32>
    %222 = arith.divf %220, %221 : vector<8x128xf32>
    %223 = math.tanh %217 : vector<8x128xf32>
    %224 = vector.extract_strided_slice %222 {offsets = [0, 0], sizes = [8, 32], strides = [1, 1]} : vector<8x128xf32> to vector<8x32xf32>
    %225 = vector.extract_strided_slice %222 {offsets = [0, 32], sizes = [8, 32], strides = [1, 1]} : vector<8x128xf32> to vector<8x32xf32>
    %226 = vector.extract_strided_slice %223 {offsets = [0, 64], sizes = [8, 32], strides = [1, 1]} : vector<8x128xf32> to vector<8x32xf32>
    %227 = vector.extract_strided_slice %222 {offsets = [0, 96], sizes = [8, 32], strides = [1, 1]} : vector<8x128xf32> to vector<8x32xf32>
    %228 = arith.mulf %225, %191 : vector<8x32xf32>
    %229 = arith.mulf %224, %226 : vector<8x32xf32>
    %230 = arith.addf %228, %229 : vector<8x32xf32>
    %231 = math.tanh %230 : vector<8x32xf32>
    %232 = arith.mulf %227, %231 : vector<8x32xf32>
    %233 = tpu.concatenate %232, %213 in 1 : vector<8x32xf32>, vector<8x32xf32> -> vector<8x64xf32>
    %234 = arith.truncf %233 : vector<8x64xf32> to vector<8x64xbf16>
    %cst_45 = arith.constant dense<0.000000e+00> : vector<8x128xf32>
    %235 = tpu.matmul %234, %9, %cst_45 {dimension_numbers = #tpu.dot_dimension_numbers<[1], [0], [0], [1], [0, 0, 1, 1], [], []>} : vector<8x64xbf16>, vector<64x128xbf16>, vector<8x128xf32> -> vector<8x128xf32>
    %236 = vector.broadcast %10 : vector<1x128xf32> to vector<8x128xf32>
    %237 = arith.addf %235, %236 : vector<8x128xf32>
    %238 = arith.negf %237 : vector<8x128xf32>
    %239 = math.exp %238 : vector<8x128xf32>
    %cst_46 = arith.constant 1.000000e+00 : f32
    %240 = vector.broadcast %cst_46 : f32 to vector<8x128xf32>
    %241 = arith.addf %240, %239 : vector<8x128xf32>
    %242 = arith.divf %240, %241 : vector<8x128xf32>
    %243 = math.tanh %237 : vector<8x128xf32>
    %244 = vector.extract_strided_slice %242 {offsets = [0, 0], sizes = [8, 32], strides = [1, 1]} : vector<8x128xf32> to vector<8x32xf32>
    %245 = vector.extract_strided_slice %242 {offsets = [0, 32], sizes = [8, 32], strides = [1, 1]} : vector<8x128xf32> to vector<8x32xf32>
    %246 = vector.extract_strided_slice %243 {offsets = [0, 64], sizes = [8, 32], strides = [1, 1]} : vector<8x128xf32> to vector<8x32xf32>
    %247 = vector.extract_strided_slice %242 {offsets = [0, 96], sizes = [8, 32], strides = [1, 1]} : vector<8x128xf32> to vector<8x32xf32>
    %248 = arith.mulf %245, %211 : vector<8x32xf32>
    %249 = arith.mulf %244, %246 : vector<8x32xf32>
    %250 = arith.addf %248, %249 : vector<8x32xf32>
    %251 = math.tanh %250 : vector<8x32xf32>
    %252 = arith.mulf %247, %251 : vector<8x32xf32>
    %253 = vector.extract_strided_slice %7 {offsets = [48, 0], sizes = [8, 128], strides = [1, 1]} : vector<64x128xf32> to vector<8x128xf32>
    %254 = arith.truncf %232 : vector<8x32xf32> to vector<8x32xbf16>
    %cst_47 = arith.constant dense<0.000000e+00> : vector<8x128xf32>
    %255 = tpu.matmul %254, %8, %cst_47 {dimension_numbers = #tpu.dot_dimension_numbers<[1], [0], [0], [1], [0, 0, 1, 1], [], []>} : vector<8x32xbf16>, vector<32x128xbf16>, vector<8x128xf32> -> vector<8x128xf32>
    %256 = arith.addf %253, %255 : vector<8x128xf32>
    %257 = arith.negf %256 : vector<8x128xf32>
    %258 = math.exp %257 : vector<8x128xf32>
    %cst_48 = arith.constant 1.000000e+00 : f32
    %259 = vector.broadcast %cst_48 : f32 to vector<8x128xf32>
    %260 = arith.addf %259, %258 : vector<8x128xf32>
    %261 = arith.divf %259, %260 : vector<8x128xf32>
    %262 = math.tanh %256 : vector<8x128xf32>
    %263 = vector.extract_strided_slice %261 {offsets = [0, 0], sizes = [8, 32], strides = [1, 1]} : vector<8x128xf32> to vector<8x32xf32>
    %264 = vector.extract_strided_slice %261 {offsets = [0, 32], sizes = [8, 32], strides = [1, 1]} : vector<8x128xf32> to vector<8x32xf32>
    %265 = vector.extract_strided_slice %262 {offsets = [0, 64], sizes = [8, 32], strides = [1, 1]} : vector<8x128xf32> to vector<8x32xf32>
    %266 = vector.extract_strided_slice %261 {offsets = [0, 96], sizes = [8, 32], strides = [1, 1]} : vector<8x128xf32> to vector<8x32xf32>
    %267 = arith.mulf %264, %230 : vector<8x32xf32>
    %268 = arith.mulf %263, %265 : vector<8x32xf32>
    %269 = arith.addf %267, %268 : vector<8x32xf32>
    %270 = math.tanh %269 : vector<8x32xf32>
    %271 = arith.mulf %266, %270 : vector<8x32xf32>
    %272 = tpu.concatenate %271, %252 in 1 : vector<8x32xf32>, vector<8x32xf32> -> vector<8x64xf32>
    %273 = arith.truncf %272 : vector<8x64xf32> to vector<8x64xbf16>
    %cst_49 = arith.constant dense<0.000000e+00> : vector<8x128xf32>
    %274 = tpu.matmul %273, %9, %cst_49 {dimension_numbers = #tpu.dot_dimension_numbers<[1], [0], [0], [1], [0, 0, 1, 1], [], []>} : vector<8x64xbf16>, vector<64x128xbf16>, vector<8x128xf32> -> vector<8x128xf32>
    %275 = vector.broadcast %10 : vector<1x128xf32> to vector<8x128xf32>
    %276 = arith.addf %274, %275 : vector<8x128xf32>
    %277 = arith.negf %276 : vector<8x128xf32>
    %278 = math.exp %277 : vector<8x128xf32>
    %cst_50 = arith.constant 1.000000e+00 : f32
    %279 = vector.broadcast %cst_50 : f32 to vector<8x128xf32>
    %280 = arith.addf %279, %278 : vector<8x128xf32>
    %281 = arith.divf %279, %280 : vector<8x128xf32>
    %282 = math.tanh %276 : vector<8x128xf32>
    %283 = vector.extract_strided_slice %281 {offsets = [0, 0], sizes = [8, 32], strides = [1, 1]} : vector<8x128xf32> to vector<8x32xf32>
    %284 = vector.extract_strided_slice %281 {offsets = [0, 32], sizes = [8, 32], strides = [1, 1]} : vector<8x128xf32> to vector<8x32xf32>
    %285 = vector.extract_strided_slice %282 {offsets = [0, 64], sizes = [8, 32], strides = [1, 1]} : vector<8x128xf32> to vector<8x32xf32>
    %286 = vector.extract_strided_slice %281 {offsets = [0, 96], sizes = [8, 32], strides = [1, 1]} : vector<8x128xf32> to vector<8x32xf32>
    %287 = arith.mulf %284, %250 : vector<8x32xf32>
    %288 = arith.mulf %283, %285 : vector<8x32xf32>
    %289 = arith.addf %287, %288 : vector<8x32xf32>
    %290 = math.tanh %289 : vector<8x32xf32>
    %291 = arith.mulf %286, %290 : vector<8x32xf32>
    %292 = vector.extract_strided_slice %7 {offsets = [56, 0], sizes = [8, 128], strides = [1, 1]} : vector<64x128xf32> to vector<8x128xf32>
    %293 = arith.truncf %271 : vector<8x32xf32> to vector<8x32xbf16>
    %cst_51 = arith.constant dense<0.000000e+00> : vector<8x128xf32>
    %294 = tpu.matmul %293, %8, %cst_51 {dimension_numbers = #tpu.dot_dimension_numbers<[1], [0], [0], [1], [0, 0, 1, 1], [], []>} : vector<8x32xbf16>, vector<32x128xbf16>, vector<8x128xf32> -> vector<8x128xf32>
    %295 = arith.addf %292, %294 : vector<8x128xf32>
    %296 = arith.negf %295 : vector<8x128xf32>
    %297 = math.exp %296 : vector<8x128xf32>
    %cst_52 = arith.constant 1.000000e+00 : f32
    %298 = vector.broadcast %cst_52 : f32 to vector<8x128xf32>
    %299 = arith.addf %298, %297 : vector<8x128xf32>
    %300 = arith.divf %298, %299 : vector<8x128xf32>
    %301 = math.tanh %295 : vector<8x128xf32>
    %302 = vector.extract_strided_slice %300 {offsets = [0, 0], sizes = [8, 32], strides = [1, 1]} : vector<8x128xf32> to vector<8x32xf32>
    %303 = vector.extract_strided_slice %300 {offsets = [0, 32], sizes = [8, 32], strides = [1, 1]} : vector<8x128xf32> to vector<8x32xf32>
    %304 = vector.extract_strided_slice %301 {offsets = [0, 64], sizes = [8, 32], strides = [1, 1]} : vector<8x128xf32> to vector<8x32xf32>
    %305 = vector.extract_strided_slice %300 {offsets = [0, 96], sizes = [8, 32], strides = [1, 1]} : vector<8x128xf32> to vector<8x32xf32>
    %306 = arith.mulf %303, %269 : vector<8x32xf32>
    %307 = arith.mulf %302, %304 : vector<8x32xf32>
    %308 = arith.addf %306, %307 : vector<8x32xf32>
    %309 = math.tanh %308 : vector<8x32xf32>
    %310 = arith.mulf %305, %309 : vector<8x32xf32>
    %311 = tpu.concatenate %310, %291 in 1 : vector<8x32xf32>, vector<8x32xf32> -> vector<8x64xf32>
    %312 = arith.truncf %311 : vector<8x64xf32> to vector<8x64xbf16>
    %cst_53 = arith.constant dense<0.000000e+00> : vector<8x128xf32>
    %313 = tpu.matmul %312, %9, %cst_53 {dimension_numbers = #tpu.dot_dimension_numbers<[1], [0], [0], [1], [0, 0, 1, 1], [], []>} : vector<8x64xbf16>, vector<64x128xbf16>, vector<8x128xf32> -> vector<8x128xf32>
    %314 = vector.broadcast %10 : vector<1x128xf32> to vector<8x128xf32>
    %315 = arith.addf %313, %314 : vector<8x128xf32>
    %316 = arith.negf %315 : vector<8x128xf32>
    %317 = math.exp %316 : vector<8x128xf32>
    %cst_54 = arith.constant 1.000000e+00 : f32
    %318 = vector.broadcast %cst_54 : f32 to vector<8x128xf32>
    %319 = arith.addf %318, %317 : vector<8x128xf32>
    %320 = arith.divf %318, %319 : vector<8x128xf32>
    %321 = math.tanh %315 : vector<8x128xf32>
    %322 = vector.extract_strided_slice %320 {offsets = [0, 0], sizes = [8, 32], strides = [1, 1]} : vector<8x128xf32> to vector<8x32xf32>
    %323 = vector.extract_strided_slice %320 {offsets = [0, 32], sizes = [8, 32], strides = [1, 1]} : vector<8x128xf32> to vector<8x32xf32>
    %324 = vector.extract_strided_slice %321 {offsets = [0, 64], sizes = [8, 32], strides = [1, 1]} : vector<8x128xf32> to vector<8x32xf32>
    %325 = vector.extract_strided_slice %320 {offsets = [0, 96], sizes = [8, 32], strides = [1, 1]} : vector<8x128xf32> to vector<8x32xf32>
    %326 = arith.mulf %323, %289 : vector<8x32xf32>
    %327 = arith.mulf %322, %324 : vector<8x32xf32>
    %328 = arith.addf %326, %327 : vector<8x32xf32>
    %329 = math.tanh %328 : vector<8x32xf32>
    %330 = arith.mulf %325, %329 : vector<8x32xf32>
    %c0_55 = arith.constant 0 : index
    %c0_56 = arith.constant 0 : index
    %331 = vector.load %arg9[%c0_55, %c0_56] : memref<1x32xf32, #tpu.memory_space<vmem>>, vector<1x32xf32>
    %332 = vector.broadcast %331 : vector<1x32xf32> to vector<8x32xf32>
    %333 = arith.mulf %330, %332 : vector<8x32xf32>
    %cst_57 = arith.constant dense<0.000000e+00> : vector<8xf32>
    %334 = vector.multi_reduction <add>, %333, %cst_57 [1] : vector<8x32xf32> to vector<8xf32>
    %335 = vector.shape_cast %334 : vector<8xf32> to vector<8x1xf32>
    %c0_58 = arith.constant 0 : index
    %c0_59 = arith.constant 0 : index
    %336 = memref.load %arg10[%c0_58, %c0_59] : memref<1x1xf32, #tpu.memory_space<smem>>
    %337 = vector.broadcast %336 : f32 to vector<8x1xf32>
    %338 = arith.addf %335, %337 : vector<8x1xf32>
    %339 = tpu.concatenate %310, %308, %330, %328 in 1 : vector<8x32xf32>, vector<8x32xf32>, vector<8x32xf32>, vector<8x32xf32> -> vector<8x128xf32>
    %c0_60 = arith.constant 0 : index
    %c0_61 = arith.constant 0 : index
    %340 = vector.load %arg12[%c0_60, %c0_61] : memref<8x128xf32, #tpu.memory_space<vmem>>, vector<8x128xf32>
    tpu.vector_store %arg12[%c0_60, %c0_61], %339 {strides = array<i32>} : memref<8x128xf32, #tpu.memory_space<vmem>>, vector<8x128xf32>,
    %341 = arith.negf %338 : vector<8x1xf32>
    %342 = math.exp %341 : vector<8x1xf32>
    %cst_62 = arith.constant 1.000000e+00 : f32
    %343 = vector.broadcast %cst_62 : f32 to vector<8x1xf32>
    %344 = arith.addf %343, %342 : vector<8x1xf32>
    %345 = arith.divf %343, %344 : vector<8x1xf32>
    %c0_63 = arith.constant 0 : index
    %c0_64 = arith.constant 0 : index
    %346 = vector.load %arg11[%c0_63, %c0_64] : memref<8x1xf32, #tpu.memory_space<vmem>>, vector<8x1xf32>
    tpu.vector_store %arg11[%c0_63, %c0_64], %345 {strides = array<i32>} : memref<8x1xf32, #tpu.memory_space<vmem>>, vector<8x1xf32>,
    return
  }
  func.func @transform_0(%arg0: i32) -> (i32, i32, i32) {
    %c0_i32 = arith.constant 0 : i32
    %c0_i32_0 = arith.constant 0 : i32
    %c0_i32_1 = arith.constant 0 : i32
    return %c0_i32, %arg0, %c0_i32_0 : i32, i32, i32
  }
  func.func @transform_1(%arg0: i32) -> (i32, i32) {
    %c0_i32 = arith.constant 0 : i32
    %c0_i32_0 = arith.constant 0 : i32
    %c0_i32_1 = arith.constant 0 : i32
    return %c0_i32, %c0_i32_0 : i32, i32
  }
  func.func @transform_2(%arg0: i32) -> (i32, i32) {
    %c0_i32 = arith.constant 0 : i32
    %c0_i32_0 = arith.constant 0 : i32
    %c0_i32_1 = arith.constant 0 : i32
    return %c0_i32, %c0_i32_0 : i32, i32
  }
  func.func @transform_3(%arg0: i32) -> (i32, i32) {
    %c0_i32 = arith.constant 0 : i32
    %c0_i32_0 = arith.constant 0 : i32
    %c0_i32_1 = arith.constant 0 : i32
    return %c0_i32, %c0_i32_0 : i32, i32
  }
  func.func @transform_4(%arg0: i32) -> (i32, i32) {
    %c0_i32 = arith.constant 0 : i32
    %c0_i32_0 = arith.constant 0 : i32
    %c0_i32_1 = arith.constant 0 : i32
    return %c0_i32, %c0_i32_0 : i32, i32
  }
  func.func @transform_5(%arg0: i32) -> (i32, i32) {
    %c0_i32 = arith.constant 0 : i32
    %c0_i32_0 = arith.constant 0 : i32
    %c0_i32_1 = arith.constant 0 : i32
    return %c0_i32, %c0_i32_0 : i32, i32
  }
  func.func @transform_6(%arg0: i32) -> (i32, i32, i32) {
    %c0_i32 = arith.constant 0 : i32
    %c0_i32_0 = arith.constant 0 : i32
    %c0_i32_1 = arith.constant 0 : i32
    return %c0_i32, %arg0, %c0_i32_0 : i32, i32, i32
  }
  func.func @transform_7(%arg0: i32) -> (i32, i32, i32) {
    %c0_i32 = arith.constant 0 : i32
    %c0_i32_0 = arith.constant 0 : i32
    %c0_i32_1 = arith.constant 0 : i32
    return %c0_i32, %arg0, %c0_i32_0 : i32, i32, i32
  }
  func.func @transform_8(%arg0: i32) -> (i32, i32) {
    %c0_i32 = arith.constant 0 : i32
    %c0_i32_0 = arith.constant 0 : i32
    %c0_i32_1 = arith.constant 0 : i32
    return %c0_i32, %c0_i32_0 : i32, i32
  }
  func.func @transform_9(%arg0: i32) -> (i32, i32) {
    %c0_i32 = arith.constant 0 : i32
    %c0_i32_0 = arith.constant 0 : i32
    %c0_i32_1 = arith.constant 0 : i32
    return %c0_i32, %c0_i32_0 : i32, i32
  }
  func.func @transform_10(%arg0: i32) -> (i32, i32) {
    %c0_i32 = arith.constant 0 : i32
    %c0_i32_0 = arith.constant 0 : i32
    return %arg0, %c0_i32 : i32, i32
  }
  func.func @transform_11(%arg0: i32) -> (i32, i32) {
    %c0_i32 = arith.constant 0 : i32
    %c0_i32_0 = arith.constant 0 : i32
    return %arg0, %c0_i32 : i32, i32
  }
}

</mosaic_0001>

<llo_original>
// kernel: forward.1
$region0: #{forward.1}
  #allocation0 [shape = 'u32[]', space=smem, size = 0x4, offset = 0x4, fixed_abs, tag = 'smem constant byte address 0x4 - core index']
  #allocation1 [shape = 'u32[144,128]{1,0:T(1,128)}', space=vmem, size = 0x12000, scoped, tag = 'internal scratch']
  #allocation2 [shape = 'f32[1,1]{1,0:T(1,128)S(6)}', space=smem, size = 0x200, scoped, tag = 'scoped memory for forward.1']
  %s0 = inlined_call_operand.vmem [shape: f32[8,8,32], index: 0, kind: input, shape index: {}]
  %s1 = inlined_call_operand.vmem [shape: bf16[32,128], index: 1, kind: input, shape index: {}]
  %s2 = inlined_call_operand.vmem [shape: bf16[32,128], index: 2, kind: input, shape index: {}]
  %s3 = inlined_call_operand.vmem [shape: f32[1,128], index: 3, kind: input, shape index: {}]
  %s4 = inlined_call_operand.vmem [shape: bf16[64,128], index: 4, kind: input, shape index: {}]
  %s5 = inlined_call_operand.vmem [shape: f32[1,128], index: 5, kind: input, shape index: {}]
  %s6 = inlined_call_operand.vmem [shape: f32[2,8,32], index: 6, kind: input, shape index: {}]
  %s7 = inlined_call_operand.vmem [shape: f32[2,8,32], index: 7, kind: input, shape index: {}]
  %s8 = inlined_call_operand.vmem [shape: f32[1,32], index: 8, kind: input, shape index: {}]
  %s9 = inlined_call_operand.<no memory space> [shape: f32[1,1], index: 9, kind: input, shape index: {}]
  %s10 = inlined_call_operand.vmem [shape: f32[8,1], index: 10, kind: output, shape index: {0}]
  %s11 = inlined_call_operand.vmem [shape: f32[8,128], index: 11, kind: output, shape index: {1}]
  %12 = xla_tuple %s10, %s11
  %s13 = sld [smem:[#allocation0]]
  $region58: #{forward.1} parent=0
    _
  %s15 = ssub.s32 1, %s13
  %s16 = scalar_select 0, %s15, %s13
  %17 = sst [smem:[#allocation2]] %s9
  // Predicated region
  $region2: #{forward.1} parent=0 // pred_check
    _
  $region3: #{forward.1} parent=0 // pred_check_branch
    %19 = sbr.rel (0) target = $region5
  $region4: #{forward.1} parent=0 // pred_region
    _
  $region5: #{forward.1} parent=0 // pred_fallthru
    _
  // Predicated region
  $region6: #{forward.1} parent=0 // pred_check
    _
  $region7: #{forward.1} parent=0 // pred_check_branch
    %21 = sbr.rel (0) target = $region9
  $region8: #{forward.1} parent=0 // pred_region
    _
  $region9: #{forward.1} parent=0 // pred_fallthru
    _
  // Predicated region
  $region10: #{forward.1} parent=0 // pred_check
    _
  $region11: #{forward.1} parent=0 // pred_check_branch
    %23 = sbr.rel (0) target = $region13
  $region12: #{forward.1} parent=0 // pred_region
    _
  $region13: #{forward.1} parent=0 // pred_fallthru
    _
  // Predicated region
  $region14: #{forward.1} parent=0 // pred_check
    _
  $region15: #{forward.1} parent=0 // pred_check_branch
    %25 = sbr.rel (0) target = $region17
  $region16: #{forward.1} parent=0 // pred_region
    _
  $region17: #{forward.1} parent=0 // pred_fallthru
    _
  // Predicated region
  $region18: #{forward.1} parent=0 // pred_check
    _
  $region19: #{forward.1} parent=0 // pred_check_branch
    %27 = sbr.rel (0) target = $region21
  $region20: #{forward.1} parent=0 // pred_region
    _
  $region21: #{forward.1} parent=0 // pred_fallthru
    _
  // Predicated region
  $region22: #{forward.1} parent=0 // pred_check
    _
  $region23: #{forward.1} parent=0 // pred_check_branch
    %29 = sbr.rel (0) target = $region25
  $region24: #{forward.1} parent=0 // pred_region
    _
  $region25: #{forward.1} parent=0 // pred_fallthru
    _
  // Predicated region
  $region26: #{forward.1} parent=0 // pred_check
    _
  $region27: #{forward.1} parent=0 // pred_check_branch
    %31 = sbr.rel (0) target = $region29
  $region28: #{forward.1} parent=0 // pred_region
    _
  $region29: #{forward.1} parent=0 // pred_fallthru
    _
  // Predicated region
  $region30: #{forward.1} parent=0 // pred_check
    _
  $region31: #{forward.1} parent=0 // pred_check_branch
    %33 = sbr.rel (0) target = $region33
  $region32: #{forward.1} parent=0 // pred_region
    _
  $region33: #{forward.1} parent=0 // pred_fallthru
    _
  // Predicated region
  $region34: #{forward.1} parent=0 // pred_check
    _
  $region35: #{forward.1} parent=0 // pred_check_branch
    %35 = sbr.rel (0) target = $region37
  $region36: #{forward.1} parent=0 // pred_region
    _
  $region37: #{forward.1} parent=0 // pred_fallthru
    _
  // Predicated region
  $region38: #{forward.1} parent=0 // pred_check
    _
  $region39: #{forward.1} parent=0 // pred_check_branch
    %37 = sbr.rel (0) target = $region41
  $region40: #{forward.1} parent=0 // pred_region
    _
  $region41: #{forward.1} parent=0 // pred_fallthru
    _
  %v39 = vld [vmem:[%s0] sm:$0xff]
  %v40 = vld [vmem:[%s0 + $0x8] sm:$0xff]
  %v41 = vld [vmem:[%s0 + $0x10] sm:$0xff]
  %v42 = vld [vmem:[%s0 + $0x18] sm:$0xff]
  %v43 = vld [vmem:[%s0 + $0x20] sm:$0xff]
  %v44 = vld [vmem:[%s0 + $0x28] sm:$0xff]
  %v45 = vld [vmem:[%s0 + $0x30] sm:$0xff]
  %v46 = vld [vmem:[%s0 + $0x38] sm:$0xff]
  %v47 = vpack.c.bf16 %v39, %v39
  %v48 = vpack.c.bf16 %v40, %v40
  %v49 = vpack.c.bf16 %v41, %v41
  %v50 = vpack.c.bf16 %v42, %v42
  %v51 = vpack.c.bf16 %v43, %v43
  %v52 = vpack.c.bf16 %v44, %v44
  %v53 = vpack.c.bf16 %v45, %v45
  %v54 = vpack.c.bf16 %v46, %v46
  %v55 = vld [vmem:[%s1] sm:$0xf]
  %v56 = vld [vmem:[%s1 + $0x4] sm:$0xf]
  %v57 = vld [vmem:[%s1 + $0x8] sm:$0xf]
  %v58 = vld [vmem:[%s1 + $0xc] sm:$0xf]
  %v59 = vld [vmem:[%s3] sm:$0x1]
  %v61 = vlaneseq
  %v62 = vshrl.u32 %v61, 7
  %v63 = vsub.s32 0, %v62
  %v64 = vrot.slane %v59, %v63
  %v74 = vunpack.c.l.b16 %v47
  %v75 = vunpack.c.l.b16 %v48
  %v76 = vunpack.c.l.b16 %v49
  %v77 = vunpack.c.l.b16 %v50
  %v78 = vunpack.c.l.b16 %v51
  %v79 = vunpack.c.l.b16 %v52
  %v80 = vunpack.c.l.b16 %v53
  %v81 = vunpack.c.l.b16 %v54
  %v82 = vpack.c.b16 %v75, %v74
  %v83 = vpack.c.b16 %v77, %v76
  %v84 = vpack.c.b16 %v79, %v78
  %v85 = vpack.c.b16 %v81, %v80
  %v90 = vunpack.c.l.b16 %v55
  %v91 = vunpack.c.l.b16 %v56
  %v92 = vunpack.c.l.b16 %v57
  %v93 = vunpack.c.l.b16 %v58
  %v94 = vpack.c.b16 %v91, %v90
  %v95 = vpack.c.b16 %v93, %v92
  %vm98 = vcmask 261120
  %v100 = vsel %vm98, %v82, 0
  %v103 = vsel %vm98, %v83, 0
  %v106 = vsel %vm98, %v84, 0
  %v109 = vsel %vm98, %v85, 0
  %111 = vmatprep.subr.bf16.mxu0 0
  %112 = vmatpush1.bf16.msra.mxu0 %v94
  %113 = vmatprep.subr.bf16.mxu0 0
  %114 = vmatpush1.bf16.msra.mxu0 %v95
  %115 = vmatprep.subr.bf16.mxu0 0
  %116 = vmatpush1.bf16.msra.mxu0 0
  %117 = vmatprep.subr.bf16.mxu0 0
  %118 = vmatpush1.bf16.msra.mxu0 0
  %119 = vmatprep.subr.bf16.mxu0 0
  %120 = vmatpush1.bf16.msra.mxu0 0
  %121 = vmatprep.subr.bf16.mxu0 0
  %122 = vmatpush1.bf16.msra.mxu0 0
  %123 = vmatprep.subr.bf16.mxu0 0
  %124 = vmatpush1.bf16.msra.mxu0 0
  %125 = vmatprep.subr.bf16.mxu0 0
  %126 = vmatpush1.bf16.msra.mxu0 0
  %127 = vmatprep.subr.bf16.mxu0 0
  %128 = vmatpush1.bf16.msra.mxu0 0
  %129 = vmatprep.subr.bf16.mxu0 0
  %130 = vmatpush1.bf16.msra.mxu0 0
  %131 = vmatprep.subr.bf16.mxu0 0
  %132 = vmatpush1.bf16.msra.mxu0 0
  %133 = vmatprep.subr.bf16.mxu0 0
  %134 = vmatpush1.bf16.msra.mxu0 0
  %135 = vmatprep.subr.bf16.mxu0 0
  %136 = vmatpush1.bf16.msra.mxu0 0
  %137 = vmatprep.subr.bf16.mxu0 0
  %138 = vmatpush1.bf16.msra.mxu0 0
  %139 = vmatprep.subr.bf16.mxu0 0
  %140 = vmatpush1.bf16.msra.mxu0 0
  %141 = vmatprep.subr.bf16.mxu0 0
  %142 = vmatpush1.bf16.msra.mxu0 0
  %143 = vmatprep.mubr.bf16.mxu0 0
  %144 = vmatmul.mubr.bf16.gmra.mrb[0].mxu0 %v100
  %v145 = vpop.f32.mrb[0].mxu0
  %v146 = vadd.f32 %v64, %v145
  %v147 = vpop.f32.mrb[0].mxu0
  %v148 = vpop.f32.mrb[0].mxu0
  %v149 = vadd.f32 %v64, %v148
  %v150 = vpop.f32.mrb[0].mxu0
  %151 = vmatprep.mubr.bf16.mxu0 0
  %152 = vmatmul.mubr.bf16.gmra.mrb[0].mxu0 %v103
  %v153 = vpop.f32.mrb[0].mxu0
  %v154 = vadd.f32 %v64, %v153
  %v155 = vpop.f32.mrb[0].mxu0
  %v156 = vpop.f32.mrb[0].mxu0
  %v157 = vadd.f32 %v64, %v156
  %v158 = vpop.f32.mrb[0].mxu0
  %159 = vmatprep.mubr.bf16.mxu0 0
  %160 = vmatmul.mubr.bf16.gmra.mrb[0].mxu0 %v106
  %v161 = vpop.f32.mrb[0].mxu0
  %v162 = vadd.f32 %v64, %v161
  %v163 = vpop.f32.mrb[0].mxu0
  %v164 = vpop.f32.mrb[0].mxu0
  %v165 = vadd.f32 %v64, %v164
  %v166 = vpop.f32.mrb[0].mxu0
  %167 = vmatprep.mubr.bf16.mxu0 0
  %168 = vmatmul.mubr.bf16.gmra.mrb[0].mxu0 %v109
  %v169 = vpop.f32.mrb[0].mxu0
  %v170 = vadd.f32 %v64, %v169
  %v171 = vpop.f32.mrb[0].mxu0
  %v172 = vpop.f32.mrb[0].mxu0
  %v173 = vadd.f32 %v64, %v172
  %v174 = vpop.f32.mrb[0].mxu0
  %175 = vdwg.mxu0
  %v176 = vld [vmem:[%s2] sm:$0xf]
  %v177 = vld [vmem:[%s2 + $0x4] sm:$0xf]
  %v178 = vld [vmem:[%s2 + $0x8] sm:$0xf]
  %v179 = vld [vmem:[%s2 + $0xc] sm:$0xf]
  %v180 = vld [vmem:[%s4] sm:$0xf]
  %v181 = vld [vmem:[%s4 + $0x4] sm:$0xf]
  %v182 = vld [vmem:[%s4 + $0x8] sm:$0xf]
  %v183 = vld [vmem:[%s4 + $0xc] sm:$0xf]
  %v184 = vld [vmem:[%s4 + $0x10] sm:$0xf]
  %v185 = vld [vmem:[%s4 + $0x14] sm:$0xf]
  %v186 = vld [vmem:[%s4 + $0x18] sm:$0xf]
  %v187 = vld [vmem:[%s4 + $0x1c] sm:$0xf]
  %v188 = vld [vmem:[%s5] sm:$0x1]
  %v189 = vld [vmem:[%s6] sm:$0xff]
  %s190 = scalar_lea.vmem %s6, 8
  %v191 = vld [vmem:[%s190] sm:$0xff]
  %v192 = vld [vmem:[%s7] sm:$0xff]
  %s193 = scalar_lea.vmem %s7, 8
  %v194 = vld [vmem:[%s193] sm:$0xff]
  %v195 = vpack.c.bf16 %v189, %v189
  %v200 = vunpack.c.l.b16 %v176
  %v201 = vunpack.c.l.b16 %v177
  %v202 = vunpack.c.l.b16 %v178
  %v203 = vunpack.c.l.b16 %v179
  %v204 = vpack.c.b16 %v201, %v200
  %v205 = vpack.c.b16 %v203, %v202
  %v209 = vsel %vm98, %v195, 0
  %211 = vmatprep.subr.bf16.mxu0 0
  %212 = vmatpush1.bf16.msra.mxu0 %v204
  %213 = vmatprep.subr.bf16.mxu0 0
  %214 = vmatpush1.bf16.msra.mxu0 %v205
  %215 = vmatprep.subr.bf16.mxu0 0
  %216 = vmatpush1.bf16.msra.mxu0 0
  %217 = vmatprep.subr.bf16.mxu0 0
  %218 = vmatpush1.bf16.msra.mxu0 0
  %219 = vmatprep.subr.bf16.mxu0 0
  %220 = vmatpush1.bf16.msra.mxu0 0
  %221 = vmatprep.subr.bf16.mxu0 0
  %222 = vmatpush1.bf16.msra.mxu0 0
  %223 = vmatprep.subr.bf16.mxu0 0
  %224 = vmatpush1.bf16.msra.mxu0 0
  %225 = vmatprep.subr.bf16.mxu0 0
  %226 = vmatpush1.bf16.msra.mxu0 0
  %227 = vmatprep.subr.bf16.mxu0 0
  %228 = vmatpush1.bf16.msra.mxu0 0
  %229 = vmatprep.subr.bf16.mxu0 0
  %230 = vmatpush1.bf16.msra.mxu0 0
  %231 = vmatprep.subr.bf16.mxu0 0
  %232 = vmatpush1.bf16.msra.mxu0 0
  %233 = vmatprep.subr.bf16.mxu0 0
  %234 = vmatpush1.bf16.msra.mxu0 0
  %235 = vmatprep.subr.bf16.mxu0 0
  %236 = vmatpush1.bf16.msra.mxu0 0
  %237 = vmatprep.subr.bf16.mxu0 0
  %238 = vmatpush1.bf16.msra.mxu0 0
  %239 = vmatprep.subr.bf16.mxu0 0
  %240 = vmatpush1.bf16.msra.mxu0 0
  %241 = vmatprep.subr.bf16.mxu0 0
  %242 = vmatpush1.bf16.msra.mxu0 0
  %243 = vmatprep.mubr.bf16.mxu0 0
  %244 = vmatmul.mubr.bf16.gmra.mrb[0].mxu0 %v209
  %v245 = vpop.f32.mrb[0].mxu0
  %v246 = vadd.f32 0.0, %v245
  %v247 = vpop.f32.mrb[0].mxu0
  %v248 = vpop.f32.mrb[0].mxu0
  %v249 = vpop.f32.mrb[0].mxu0
  %250 = vdwg.mxu0
  %v251 = vadd.f32 %v146, %v246
  %v252 = vxor.u32 %v251, 2147483648
  %v253 = vmul.f32 %v252, 1.442695
  %v254 = vpow.pop %v253
  %v255 = vadd.f32 %v254, 1.0
  %v256 = vrcp.pop %v255
  %v257 = vmul.f32 1.0, %v256
  %v258 = vtanh.pop %v251
  %260 = vrot.lane.b32.xlu0 %v192, 32
  %v261 = vpop.permute.xlu0 %260
  %v263 = vmul.f32 %v257, %v261
  %265 = vrot.lane.b32.xlu0 %v258, 64
  %v266 = vpop.permute.xlu0 %265
  %v268 = vmul.f32 %v257, %v266
  %270 = vrot.lane.b32.xlu0 %v268, 32
  %v271 = vpop.permute.xlu0 %270
  %v273 = vadd.f32 %v263, %v271
  %v274 = vtanh.pop %v273
  %276 = vrot.lane.b32.xlu0 %v274, 64
  %v277 = vpop.permute.xlu0 %276
  %v279 = vmul.f32 %v257, %v277
  %281 = vrot.lane.b32.xlu0 %v279, 32
  %v282 = vpop.permute.xlu0 %281
  %285 = vrot.lane.b32.xlu0 %v191, 32
  %v286 = vpop.permute.xlu0 %285
  %v288 = vsel %vm98, %v282, %v286
  %v289 = vpack.c.bf16 %v288, %v288
  %v291 = vlaneseq
  %v292 = vshrl.u32 %v291, 7
  %v293 = vsub.s32 0, %v292
  %v294 = vrot.slane %v188, %v293
  %v304 = vunpack.c.l.b16 %v180
  %v305 = vunpack.c.l.b16 %v181
  %v306 = vunpack.c.l.b16 %v182
  %v307 = vunpack.c.l.b16 %v183
  %v308 = vunpack.c.l.b16 %v184
  %v309 = vunpack.c.l.b16 %v185
  %v310 = vunpack.c.l.b16 %v186
  %v311 = vunpack.c.l.b16 %v187
  %v312 = vpack.c.b16 %v305, %v304
  %v313 = vpack.c.b16 %v307, %v306
  %v314 = vpack.c.b16 %v309, %v308
  %v315 = vpack.c.b16 %v311, %v310
  %vm320 = vcmask 523264
  %v322 = vsel %vm320, %v289, 0
  %324 = vmatprep.subr.bf16.mxu0 0
  %325 = vmatpush1.bf16.msra.mxu0 %v312
  %326 = vmatprep.subr.bf16.mxu0 0
  %327 = vmatpush1.bf16.msra.mxu0 %v313
  %328 = vmatprep.subr.bf16.mxu0 0
  %329 = vmatpush1.bf16.msra.mxu0 %v314
  %330 = vmatprep.subr.bf16.mxu0 0
  %331 = vmatpush1.bf16.msra.mxu0 %v315
  %332 = vmatprep.subr.bf16.mxu0 0
  %333 = vmatpush1.bf16.msra.mxu0 0
  %334 = vmatprep.subr.bf16.mxu0 0
  %335 = vmatpush1.bf16.msra.mxu0 0
  %336 = vmatprep.subr.bf16.mxu0 0
  %337 = vmatpush1.bf16.msra.mxu0 0
  %338 = vmatprep.subr.bf16.mxu0 0
  %339 = vmatpush1.bf16.msra.mxu0 0
  %340 = vmatprep.subr.bf16.mxu0 0
  %341 = vmatpush1.bf16.msra.mxu0 0
  %342 = vmatprep.subr.bf16.mxu0 0
  %343 = vmatpush1.bf16.msra.mxu0 0
  %344 = vmatprep.subr.bf16.mxu0 0
  %345 = vmatpush1.bf16.msra.mxu0 0
  %346 = vmatprep.subr.bf16.mxu0 0
  %347 = vmatpush1.bf16.msra.mxu0 0
  %348 = vmatprep.subr.bf16.mxu0 0
  %349 = vmatpush1.bf16.msra.mxu0 0
  %350 = vmatprep.subr.bf16.mxu0 0
  %351 = vmatpush1.bf16.msra.mxu0 0
  %352 = vmatprep.subr.bf16.mxu0 0
  %353 = vmatpush1.bf16.msra.mxu0 0
  %354 = vmatprep.subr.bf16.mxu0 0
  %355 = vmatpush1.bf16.msra.mxu0 0
  %356 = vmatprep.mubr.bf16.mxu0 0
  %357 = vmatmul.mubr.bf16.gmra.mrb[0].mxu0 %v322
  %v358 = vpop.f32.mrb[0].mxu0
  %v359 = vadd.f32 %v294, %v358
  %v360 = vpop.f32.mrb[0].mxu0
  %v361 = vpop.f32.mrb[0].mxu0
  %v362 = vpop.f32.mrb[0].mxu0
  %363 = vdwg.mxu0
  %v364 = vxor.u32 %v359, 2147483648
  %v365 = vmul.f32 %v364, 1.442695
  %v366 = vpow.pop %v365
  %v367 = vadd.f32 %v366, 1.0
  %v368 = vrcp.pop %v367
  %v369 = vmul.f32 1.0, %v368
  %v370 = vtanh.pop %v359
  %372 = vrot.lane.b32.xlu0 %v194, 32
  %v373 = vpop.permute.xlu0 %372
  %v375 = vmul.f32 %v369, %v373
  %377 = vrot.lane.b32.xlu0 %v370, 64
  %v378 = vpop.permute.xlu0 %377
  %v380 = vmul.f32 %v369, %v378
  %382 = vrot.lane.b32.xlu0 %v380, 32
  %v383 = vpop.permute.xlu0 %382
  %v385 = vadd.f32 %v375, %v383
  %v386 = vtanh.pop %v385
  %388 = vrot.lane.b32.xlu0 %v386, 64
  %v389 = vpop.permute.xlu0 %388
  %v391 = vmul.f32 %v369, %v389
  %v392 = vpack.c.bf16 %v279, %v279
  %394 = vrot.lane.b32.xlu0 %v392, 32
  %v395 = vpop.permute.xlu0 %394
  %v397 = vsel %vm98, %v395, 0
  %399 = vmatprep.subr.bf16.mxu0 0
  %400 = vmatpush1.bf16.msra.mxu0 %v204
  %401 = vmatprep.subr.bf16.mxu0 0
  %402 = vmatpush1.bf16.msra.mxu0 %v205
  %403 = vmatprep.subr.bf16.mxu0 0
  %404 = vmatpush1.bf16.msra.mxu0 0
  %405 = vmatprep.subr.bf16.mxu0 0
  %406 = vmatpush1.bf16.msra.mxu0 0
  %407 = vmatprep.subr.bf16.mxu0 0
  %408 = vmatpush1.bf16.msra.mxu0 0
  %409 = vmatprep.subr.bf16.mxu0 0
  %410 = vmatpush1.bf16.msra.mxu0 0
  %411 = vmatprep.subr.bf16.mxu0 0
  %412 = vmatpush1.bf16.msra.mxu0 0
  %413 = vmatprep.subr.bf16.mxu0 0
  %414 = vmatpush1.bf16.msra.mxu0 0
  %415 = vmatprep.subr.bf16.mxu0 0
  %416 = vmatpush1.bf16.msra.mxu0 0
  %417 = vmatprep.subr.bf16.mxu0 0
  %418 = vmatpush1.bf16.msra.mxu0 0
  %419 = vmatprep.subr.bf16.mxu0 0
  %420 = vmatpush1.bf16.msra.mxu0 0
  %421 = vmatprep.subr.bf16.mxu0 0
  %422 = vmatpush1.bf16.msra.mxu0 0
  %423 = vmatprep.subr.bf16.mxu0 0
  %424 = vmatpush1.bf16.msra.mxu0 0
  %425 = vmatprep.subr.bf16.mxu0 0
  %426 = vmatpush1.bf16.msra.mxu0 0
  %427 = vmatprep.subr.bf16.mxu0 0
  %428 = vmatpush1.bf16.msra.mxu0 0
  %429 = vmatprep.subr.bf16.mxu0 0
  %430 = vmatpush1.bf16.msra.mxu0 0
  %431 = vmatprep.mubr.bf16.mxu0 0
  %432 = vmatmul.mubr.bf16.gmra.mrb[0].mxu0 %v397
  %v433 = vpop.f32.mrb[0].mxu0
  %v434 = vadd.f32 0.0, %v433
  %v435 = vpop.f32.mrb[0].mxu0
  %v436 = vpop.f32.mrb[0].mxu0
  %v437 = vpop.f32.mrb[0].mxu0
  %438 = vdwg.mxu0
  %v439 = vadd.f32 %v149, %v434
  %v440 = vxor.u32 %v439, 2147483648
  %v441 = vmul.f32 %v440, 1.442695
  %v442 = vpow.pop %v441
  %v443 = vadd.f32 %v442, 1.0
  %v444 = vrcp.pop %v443
  %v445 = vmul.f32 1.0, %v444
  %v446 = vtanh.pop %v439
  %v447 = vmul.f32 %v445, %v273
  %449 = vrot.lane.b32.xlu0 %v446, 64
  %v450 = vpop.permute.xlu0 %449
  %v452 = vmul.f32 %v445, %v450
  %454 = vrot.lane.b32.xlu0 %v452, 32
  %v455 = vpop.permute.xlu0 %454
  %v457 = vadd.f32 %v447, %v455
  %v458 = vtanh.pop %v457
  %460 = vrot.lane.b32.xlu0 %v458, 64
  %v461 = vpop.permute.xlu0 %460
  %v463 = vmul.f32 %v445, %v461
  %465 = vrot.lane.b32.xlu0 %v463, 32
  %v466 = vpop.permute.xlu0 %465
  %469 = vrot.lane.b32.xlu0 %v391, 64
  %v470 = vpop.permute.xlu0 %469
  %v472 = vsel %vm98, %v466, %v470
  %v473 = vpack.c.bf16 %v472, %v472
  %v475 = vsel %vm320, %v473, 0
  %477 = vmatprep.subr.bf16.mxu0 0
  %478 = vmatpush1.bf16.msra.mxu0 %v312
  %479 = vmatprep.subr.bf16.mxu0 0
  %480 = vmatpush1.bf16.msra.mxu0 %v313
  %481 = vmatprep.subr.bf16.mxu0 0
  %482 = vmatpush1.bf16.msra.mxu0 %v314
  %483 = vmatprep.subr.bf16.mxu0 0
  %484 = vmatpush1.bf16.msra.mxu0 %v315
  %485 = vmatprep.subr.bf16.mxu0 0
  %486 = vmatpush1.bf16.msra.mxu0 0
  %487 = vmatprep.subr.bf16.mxu0 0
  %488 = vmatpush1.bf16.msra.mxu0 0
  %489 = vmatprep.subr.bf16.mxu0 0
  %490 = vmatpush1.bf16.msra.mxu0 0
  %491 = vmatprep.subr.bf16.mxu0 0
  %492 = vmatpush1.bf16.msra.mxu0 0
  %493 = vmatprep.subr.bf16.mxu0 0
  %494 = vmatpush1.bf16.msra.mxu0 0
  %495 = vmatprep.subr.bf16.mxu0 0
  %496 = vmatpush1.bf16.msra.mxu0 0
  %497 = vmatprep.subr.bf16.mxu0 0
  %498 = vmatpush1.bf16.msra.mxu0 0
  %499 = vmatprep.subr.bf16.mxu0 0
  %500 = vmatpush1.bf16.msra.mxu0 0
  %501 = vmatprep.subr.bf16.mxu0 0
  %502 = vmatpush1.bf16.msra.mxu0 0
  %503 = vmatprep.subr.bf16.mxu0 0
  %504 = vmatpush1.bf16.msra.mxu0 0
  %505 = vmatprep.subr.bf16.mxu0 0
  %506 = vmatpush1.bf16.msra.mxu0 0
  %507 = vmatprep.subr.bf16.mxu0 0
  %508 = vmatpush1.bf16.msra.mxu0 0
  %509 = vmatprep.mubr.bf16.mxu0 0
  %510 = vmatmul.mubr.bf16.gmra.mrb[0].mxu0 %v475
  %v511 = vpop.f32.mrb[0].mxu0
  %v512 = vadd.f32 %v294, %v511
  %v513 = vpop.f32.mrb[0].mxu0
  %v514 = vpop.f32.mrb[0].mxu0
  %v515 = vpop.f32.mrb[0].mxu0
  %516 = vdwg.mxu0
  %v517 = vxor.u32 %v512, 2147483648
  %v518 = vmul.f32 %v517, 1.442695
  %v519 = vpow.pop %v518
  %v520 = vadd.f32 %v519, 1.0
  %v521 = vrcp.pop %v520
  %v522 = vmul.f32 1.0, %v521
  %v523 = vtanh.pop %v512
  %v524 = vmul.f32 %v522, %v385
  %526 = vrot.lane.b32.xlu0 %v523, 64
  %v527 = vpop.permute.xlu0 %526
  %v529 = vmul.f32 %v522, %v527
  %531 = vrot.lane.b32.xlu0 %v529, 32
  %v532 = vpop.permute.xlu0 %531
  %v534 = vadd.f32 %v524, %v532
  %v535 = vtanh.pop %v534
  %537 = vrot.lane.b32.xlu0 %v535, 64
  %v538 = vpop.permute.xlu0 %537
  %v540 = vmul.f32 %v522, %v538
  %v541 = vpack.c.bf16 %v463, %v463
  %543 = vrot.lane.b32.xlu0 %v541, 32
  %v544 = vpop.permute.xlu0 %543
  %v546 = vsel %vm98, %v544, 0
  %548 = vmatprep.subr.bf16.mxu0 0
  %549 = vmatpush1.bf16.msra.mxu0 %v204
  %550 = vmatprep.subr.bf16.mxu0 0
  %551 = vmatpush1.bf16.msra.mxu0 %v205
  %552 = vmatprep.subr.bf16.mxu0 0
  %553 = vmatpush1.bf16.msra.mxu0 0
  %554 = vmatprep.subr.bf16.mxu0 0
  %555 = vmatpush1.bf16.msra.mxu0 0
  %556 = vmatprep.subr.bf16.mxu0 0
  %557 = vmatpush1.bf16.msra.mxu0 0
  %558 = vmatprep.subr.bf16.mxu0 0
  %559 = vmatpush1.bf16.msra.mxu0 0
  %560 = vmatprep.subr.bf16.mxu0 0
  %561 = vmatpush1.bf16.msra.mxu0 0
  %562 = vmatprep.subr.bf16.mxu0 0
  %563 = vmatpush1.bf16.msra.mxu0 0
  %564 = vmatprep.subr.bf16.mxu0 0
  %565 = vmatpush1.bf16.msra.mxu0 0
  %566 = vmatprep.subr.bf16.mxu0 0
  %567 = vmatpush1.bf16.msra.mxu0 0
  %568 = vmatprep.subr.bf16.mxu0 0
  %569 = vmatpush1.bf16.msra.mxu0 0
  %570 = vmatprep.subr.bf16.mxu0 0
  %571 = vmatpush1.bf16.msra.mxu0 0
  %572 = vmatprep.subr.bf16.mxu0 0
  %573 = vmatpush1.bf16.msra.mxu0 0
  %574 = vmatprep.subr.bf16.mxu0 0
  %575 = vmatpush1.bf16.msra.mxu0 0
  %576 = vmatprep.subr.bf16.mxu0 0
  %577 = vmatpush1.bf16.msra.mxu0 0
  %578 = vmatprep.subr.bf16.mxu0 0
  %579 = vmatpush1.bf16.msra.mxu0 0
  %580 = vmatprep.mubr.bf16.mxu0 0
  %581 = vmatmul.mubr.bf16.gmra.mrb[0].mxu0 %v546
  %v582 = vpop.f32.mrb[0].mxu0
  %v583 = vadd.f32 0.0, %v582
  %v584 = vpop.f32.mrb[0].mxu0
  %v585 = vpop.f32.mrb[0].mxu0
  %v586 = vpop.f32.mrb[0].mxu0
  %587 = vdwg.mxu0
  %v588 = vadd.f32 %v154, %v583
  %v589 = vxor.u32 %v588, 2147483648
  %v590 = vmul.f32 %v589, 1.442695
  %v591 = vpow.pop %v590
  %v592 = vadd.f32 %v591, 1.0
  %v593 = vrcp.pop %v592
  %v594 = vmul.f32 1.0, %v593
  %v595 = vtanh.pop %v588
  %v596 = vmul.f32 %v594, %v457
  %598 = vrot.lane.b32.xlu0 %v595, 64
  %v599 = vpop.permute.xlu0 %598
  %v601 = vmul.f32 %v594, %v599
  %603 = vrot.lane.b32.xlu0 %v601, 32
  %v604 = vpop.permute.xlu0 %603
  %v606 = vadd.f32 %v596, %v604
  %v607 = vtanh.pop %v606
  %609 = vrot.lane.b32.xlu0 %v607, 64
  %v610 = vpop.permute.xlu0 %609
  %v612 = vmul.f32 %v594, %v610
  %614 = vrot.lane.b32.xlu0 %v612, 32
  %v615 = vpop.permute.xlu0 %614
  %618 = vrot.lane.b32.xlu0 %v540, 64
  %v619 = vpop.permute.xlu0 %618
  %v621 = vsel %vm98, %v615, %v619
  %v622 = vpack.c.bf16 %v621, %v621
  %v624 = vsel %vm320, %v622, 0
  %626 = vmatprep.subr.bf16.mxu0 0
  %627 = vmatpush1.bf16.msra.mxu0 %v312
  %628 = vmatprep.subr.bf16.mxu0 0
  %629 = vmatpush1.bf16.msra.mxu0 %v313
  %630 = vmatprep.subr.bf16.mxu0 0
  %631 = vmatpush1.bf16.msra.mxu0 %v314
  %632 = vmatprep.subr.bf16.mxu0 0
  %633 = vmatpush1.bf16.msra.mxu0 %v315
  %634 = vmatprep.subr.bf16.mxu0 0
  %635 = vmatpush1.bf16.msra.mxu0 0
  %636 = vmatprep.subr.bf16.mxu0 0
  %637 = vmatpush1.bf16.msra.mxu0 0
  %638 = vmatprep.subr.bf16.mxu0 0
  %639 = vmatpush1.bf16.msra.mxu0 0
  %640 = vmatprep.subr.bf16.mxu0 0
  %641 = vmatpush1.bf16.msra.mxu0 0
  %642 = vmatprep.subr.bf16.mxu0 0
  %643 = vmatpush1.bf16.msra.mxu0 0
  %644 = vmatprep.subr.bf16.mxu0 0
  %645 = vmatpush1.bf16.msra.mxu0 0
  %646 = vmatprep.subr.bf16.mxu0 0
  %647 = vmatpush1.bf16.msra.mxu0 0
  %648 = vmatprep.subr.bf16.mxu0 0
  %649 = vmatpush1.bf16.msra.mxu0 0
  %650 = vmatprep.subr.bf16.mxu0 0
  %651 = vmatpush1.bf16.msra.mxu0 0
  %652 = vmatprep.subr.bf16.mxu0 0
  %653 = vmatpush1.bf16.msra.mxu0 0
  %654 = vmatprep.subr.bf16.mxu0 0
  %655 = vmatpush1.bf16.msra.mxu0 0
  %656 = vmatprep.subr.bf16.mxu0 0
  %657 = vmatpush1.bf16.msra.mxu0 0
  %658 = vmatprep.mubr.bf16.mxu0 0
  %659 = vmatmul.mubr.bf16.gmra.mrb[0].mxu0 %v624
  %v660 = vpop.f32.mrb[0].mxu0
  %v661 = vadd.f32 %v294, %v660
  %v662 = vpop.f32.mrb[0].mxu0
  %v663 = vpop.f32.mrb[0].mxu0
  %v664 = vpop.f32.mrb[0].mxu0
  %665 = vdwg.mxu0
  %v666 = vxor.u32 %v661, 2147483648
  %v667 = vmul.f32 %v666, 1.442695
  %v668 = vpow.pop %v667
  %v669 = vadd.f32 %v668, 1.0
  %v670 = vrcp.pop %v669
  %v671 = vmul.f32 1.0, %v670
  %v672 = vtanh.pop %v661
  %v673 = vmul.f32 %v671, %v534
  %675 = vrot.lane.b32.xlu0 %v672, 64
  %v676 = vpop.permute.xlu0 %675
  %v678 = vmul.f32 %v671, %v676
  %680 = vrot.lane.b32.xlu0 %v678, 32
  %v681 = vpop.permute.xlu0 %680
  %v683 = vadd.f32 %v673, %v681
  %v684 = vtanh.pop %v683
  %686 = vrot.lane.b32.xlu0 %v684, 64
  %v687 = vpop.permute.xlu0 %686
  %v689 = vmul.f32 %v671, %v687
  %v690 = vpack.c.bf16 %v612, %v612
  %692 = vrot.lane.b32.xlu0 %v690, 32
  %v693 = vpop.permute.xlu0 %692
  %v695 = vsel %vm98, %v693, 0
  %697 = vmatprep.subr.bf16.mxu0 0
  %698 = vmatpush1.bf16.msra.mxu0 %v204
  %699 = vmatprep.subr.bf16.mxu0 0
  %700 = vmatpush1.bf16.msra.mxu0 %v205
  %701 = vmatprep.subr.bf16.mxu0 0
  %702 = vmatpush1.bf16.msra.mxu0 0
  %703 = vmatprep.subr.bf16.mxu0 0
  %704 = vmatpush1.bf16.msra.mxu0 0
  %705 = vmatprep.subr.bf16.mxu0 0
  %706 = vmatpush1.bf16.msra.mxu0 0
  %707 = vmatprep.subr.bf16.mxu0 0
  %708 = vmatpush1.bf16.msra.mxu0 0
  %709 = vmatprep.subr.bf16.mxu0 0
  %710 = vmatpush1.bf16.msra.mxu0 0
  %711 = vmatprep.subr.bf16.mxu0 0
  %712 = vmatpush1.bf16.msra.mxu0 0
  %713 = vmatprep.subr.bf16.mxu0 0
  %714 = vmatpush1.bf16.msra.mxu0 0
  %715 = vmatprep.subr.bf16.mxu0 0
  %716 = vmatpush1.bf16.msra.mxu0 0
  %717 = vmatprep.subr.bf16.mxu0 0
  %718 = vmatpush1.bf16.msra.mxu0 0
  %719 = vmatprep.subr.bf16.mxu0 0
  %720 = vmatpush1.bf16.msra.mxu0 0
  %721 = vmatprep.subr.bf16.mxu0 0
  %722 = vmatpush1.bf16.msra.mxu0 0
  %723 = vmatprep.subr.bf16.mxu0 0
  %724 = vmatpush1.bf16.msra.mxu0 0
  %725 = vmatprep.subr.bf16.mxu0 0
  %726 = vmatpush1.bf16.msra.mxu0 0
  %727 = vmatprep.subr.bf16.mxu0 0
  %728 = vmatpush1.bf16.msra.mxu0 0
  %729 = vmatprep.mubr.bf16.mxu0 0
  %730 = vmatmul.mubr.bf16.gmra.mrb[0].mxu0 %v695
  %v731 = vpop.f32.mrb[0].mxu0
  %v732 = vadd.f32 0.0, %v731
  %v733 = vpop.f32.mrb[0].mxu0
  %v734 = vpop.f32.mrb[0].mxu0
  %v735 = vpop.f32.mrb[0].mxu0
  %736 = vdwg.mxu0
  %v737 = vadd.f32 %v157, %v732
  %v738 = vxor.u32 %v737, 2147483648
  %v739 = vmul.f32 %v738, 1.442695
  %v740 = vpow.pop %v739
  %v741 = vadd.f32 %v740, 1.0
  %v742 = vrcp.pop %v741
  %v743 = vmul.f32 1.0, %v742
  %v744 = vtanh.pop %v737
  %v745 = vmul.f32 %v743, %v606
  %747 = vrot.lane.b32.xlu0 %v744, 64
  %v748 = vpop.permute.xlu0 %747
  %v750 = vmul.f32 %v743, %v748
  %752 = vrot.lane.b32.xlu0 %v750, 32
  %v753 = vpop.permute.xlu0 %752
  %v755 = vadd.f32 %v745, %v753
  %v756 = vtanh.pop %v755
  %758 = vrot.lane.b32.xlu0 %v756, 64
  %v759 = vpop.permute.xlu0 %758
  %v761 = vmul.f32 %v743, %v759
  %763 = vrot.lane.b32.xlu0 %v761, 32
  %v764 = vpop.permute.xlu0 %763
  %767 = vrot.lane.b32.xlu0 %v689, 64
  %v768 = vpop.permute.xlu0 %767
  %v770 = vsel %vm98, %v764, %v768
  %v771 = vpack.c.bf16 %v770, %v770
  %v773 = vsel %vm320, %v771, 0
  %775 = vmatprep.subr.bf16.mxu0 0
  %776 = vmatpush1.bf16.msra.mxu0 %v312
  %777 = vmatprep.subr.bf16.mxu0 0
  %778 = vmatpush1.bf16.msra.mxu0 %v313
  %779 = vmatprep.subr.bf16.mxu0 0
  %780 = vmatpush1.bf16.msra.mxu0 %v314
  %781 = vmatprep.subr.bf16.mxu0 0
  %782 = vmatpush1.bf16.msra.mxu0 %v315
  %783 = vmatprep.subr.bf16.mxu0 0
  %784 = vmatpush1.bf16.msra.mxu0 0
  %785 = vmatprep.subr.bf16.mxu0 0
  %786 = vmatpush1.bf16.msra.mxu0 0
  %787 = vmatprep.subr.bf16.mxu0 0
  %788 = vmatpush1.bf16.msra.mxu0 0
  %789 = vmatprep.subr.bf16.mxu0 0
  %790 = vmatpush1.bf16.msra.mxu0 0
  %791 = vmatprep.subr.bf16.mxu0 0
  %792 = vmatpush1.bf16.msra.mxu0 0
  %793 = vmatprep.subr.bf16.mxu0 0
  %794 = vmatpush1.bf16.msra.mxu0 0
  %795 = vmatprep.subr.bf16.mxu0 0
  %796 = vmatpush1.bf16.msra.mxu0 0
  %797 = vmatprep.subr.bf16.mxu0 0
  %798 = vmatpush1.bf16.msra.mxu0 0
  %799 = vmatprep.subr.bf16.mxu0 0
  %800 = vmatpush1.bf16.msra.mxu0 0
  %801 = vmatprep.subr.bf16.mxu0 0
  %802 = vmatpush1.bf16.msra.mxu0 0
  %803 = vmatprep.subr.bf16.mxu0 0
  %804 = vmatpush1.bf16.msra.mxu0 0
  %805 = vmatprep.subr.bf16.mxu0 0
  %806 = vmatpush1.bf16.msra.mxu0 0
  %807 = vmatprep.mubr.bf16.mxu0 0
  %808 = vmatmul.mubr.bf16.gmra.mrb[0].mxu0 %v773
  %v809 = vpop.f32.mrb[0].mxu0
  %v810 = vadd.f32 %v294, %v809
  %v811 = vpop.f32.mrb[0].mxu0
  %v812 = vpop.f32.mrb[0].mxu0
  %v813 = vpop.f32.mrb[0].mxu0
  %814 = vdwg.mxu0
  %v815 = vxor.u32 %v810, 2147483648
  %v816 = vmul.f32 %v815, 1.442695
  %v817 = vpow.pop %v816
  %v818 = vadd.f32 %v817, 1.0
  %v819 = vrcp.pop %v818
  %v820 = vmul.f32 1.0, %v819
  %v821 = vtanh.pop %v810
  %v822 = vmul.f32 %v820, %v683
  %824 = vrot.lane.b32.xlu0 %v821, 64
  %v825 = vpop.permute.xlu0 %824
  %v827 = vmul.f32 %v820, %v825
  %829 = vrot.lane.b32.xlu0 %v827, 32
  %v830 = vpop.permute.xlu0 %829
  %v832 = vadd.f32 %v822, %v830
  %v833 = vtanh.pop %v832
  %835 = vrot.lane.b32.xlu0 %v833, 64
  %v836 = vpop.permute.xlu0 %835
  %v838 = vmul.f32 %v820, %v836
  %v839 = vpack.c.bf16 %v761, %v761
  %841 = vrot.lane.b32.xlu0 %v839, 32
  %v842 = vpop.permute.xlu0 %841
  %v844 = vsel %vm98, %v842, 0
  %846 = vmatprep.subr.bf16.mxu0 0
  %847 = vmatpush1.bf16.msra.mxu0 %v204
  %848 = vmatprep.subr.bf16.mxu0 0
  %849 = vmatpush1.bf16.msra.mxu0 %v205
  %850 = vmatprep.subr.bf16.mxu0 0
  %851 = vmatpush1.bf16.msra.mxu0 0
  %852 = vmatprep.subr.bf16.mxu0 0
  %853 = vmatpush1.bf16.msra.mxu0 0
  %854 = vmatprep.subr.bf16.mxu0 0
  %855 = vmatpush1.bf16.msra.mxu0 0
  %856 = vmatprep.subr.bf16.mxu0 0
  %857 = vmatpush1.bf16.msra.mxu0 0
  %858 = vmatprep.subr.bf16.mxu0 0
  %859 = vmatpush1.bf16.msra.mxu0 0
  %860 = vmatprep.subr.bf16.mxu0 0
  %861 = vmatpush1.bf16.msra.mxu0 0
  %862 = vmatprep.subr.bf16.mxu0 0
  %863 = vmatpush1.bf16.msra.mxu0 0
  %864 = vmatprep.subr.bf16.mxu0 0
  %865 = vmatpush1.bf16.msra.mxu0 0
  %866 = vmatprep.subr.bf16.mxu0 0
  %867 = vmatpush1.bf16.msra.mxu0 0
  %868 = vmatprep.subr.bf16.mxu0 0
  %869 = vmatpush1.bf16.msra.mxu0 0
  %870 = vmatprep.subr.bf16.mxu0 0
  %871 = vmatpush1.bf16.msra.mxu0 0
  %872 = vmatprep.subr.bf16.mxu0 0
  %873 = vmatpush1.bf16.msra.mxu0 0
  %874 = vmatprep.subr.bf16.mxu0 0
  %875 = vmatpush1.bf16.msra.mxu0 0
  %876 = vmatprep.subr.bf16.mxu0 0
  %877 = vmatpush1.bf16.msra.mxu0 0
  %878 = vmatprep.mubr.bf16.mxu0 0
  %879 = vmatmul.mubr.bf16.gmra.mrb[0].mxu0 %v844
  %v880 = vpop.f32.mrb[0].mxu0
  %v881 = vadd.f32 0.0, %v880
  %v882 = vpop.f32.mrb[0].mxu0
  %v883 = vpop.f32.mrb[0].mxu0
  %v884 = vpop.f32.mrb[0].mxu0
  %885 = vdwg.mxu0
  %v886 = vadd.f32 %v162, %v881
  %v887 = vxor.u32 %v886, 2147483648
  %v888 = vmul.f32 %v887, 1.442695
  %v889 = vpow.pop %v888
  %v890 = vadd.f32 %v889, 1.0
  %v891 = vrcp.pop %v890
  %v892 = vmul.f32 1.0, %v891
  %v893 = vtanh.pop %v886
  %v894 = vmul.f32 %v892, %v755
  %896 = vrot.lane.b32.xlu0 %v893, 64
  %v897 = vpop.permute.xlu0 %896
  %v899 = vmul.f32 %v892, %v897
  %901 = vrot.lane.b32.xlu0 %v899, 32
  %v902 = vpop.permute.xlu0 %901
  %v904 = vadd.f32 %v894, %v902
  %v905 = vtanh.pop %v904
  %907 = vrot.lane.b32.xlu0 %v905, 64
  %v908 = vpop.permute.xlu0 %907
  %v910 = vmul.f32 %v892, %v908
  %912 = vrot.lane.b32.xlu0 %v910, 32
  %v913 = vpop.permute.xlu0 %912
  %916 = vrot.lane.b32.xlu0 %v838, 64
  %v917 = vpop.permute.xlu0 %916
  %v919 = vsel %vm98, %v913, %v917
  %v920 = vpack.c.bf16 %v919, %v919
  %v922 = vsel %vm320, %v920, 0
  %924 = vmatprep.subr.bf16.mxu0 0
  %925 = vmatpush1.bf16.msra.mxu0 %v312
  %926 = vmatprep.subr.bf16.mxu0 0
  %927 = vmatpush1.bf16.msra.mxu0 %v313
  %928 = vmatprep.subr.bf16.mxu0 0
  %929 = vmatpush1.bf16.msra.mxu0 %v314
  %930 = vmatprep.subr.bf16.mxu0 0
  %931 = vmatpush1.bf16.msra.mxu0 %v315
  %932 = vmatprep.subr.bf16.mxu0 0
  %933 = vmatpush1.bf16.msra.mxu0 0
  %934 = vmatprep.subr.bf16.mxu0 0
  %935 = vmatpush1.bf16.msra.mxu0 0
  %936 = vmatprep.subr.bf16.mxu0 0
  %937 = vmatpush1.bf16.msra.mxu0 0
  %938 = vmatprep.subr.bf16.mxu0 0
  %939 = vmatpush1.bf16.msra.mxu0 0
  %940 = vmatprep.subr.bf16.mxu0 0
  %941 = vmatpush1.bf16.msra.mxu0 0
  %942 = vmatprep.subr.bf16.mxu0 0
  %943 = vmatpush1.bf16.msra.mxu0 0
  %944 = vmatprep.subr.bf16.mxu0 0
  %945 = vmatpush1.bf16.msra.mxu0 0
  %946 = vmatprep.subr.bf16.mxu0 0
  %947 = vmatpush1.bf16.msra.mxu0 0
  %948 = vmatprep.subr.bf16.mxu0 0
  %949 = vmatpush1.bf16.msra.mxu0 0
  %950 = vmatprep.subr.bf16.mxu0 0
  %951 = vmatpush1.bf16.msra.mxu0 0
  %952 = vmatprep.subr.bf16.mxu0 0
  %953 = vmatpush1.bf16.msra.mxu0 0
  %954 = vmatprep.subr.bf16.mxu0 0
  %955 = vmatpush1.bf16.msra.mxu0 0
  %956 = vmatprep.mubr.bf16.mxu0 0
  %957 = vmatmul.mubr.bf16.gmra.mrb[0].mxu0 %v922
  %v958 = vpop.f32.mrb[0].mxu0
  %v959 = vadd.f32 %v294, %v958
  %v960 = vpop.f32.mrb[0].mxu0
  %v961 = vpop.f32.mrb[0].mxu0
  %v962 = vpop.f32.mrb[0].mxu0
  %963 = vdwg.mxu0
  %v964 = vxor.u32 %v959, 2147483648
  %v965 = vmul.f32 %v964, 1.442695
  %v966 = vpow.pop %v965
  %v967 = vadd.f32 %v966, 1.0
  %v968 = vrcp.pop %v967
  %v969 = vmul.f32 1.0, %v968
  %v970 = vtanh.pop %v959
  %v971 = vmul.f32 %v969, %v832
  %973 = vrot.lane.b32.xlu0 %v970, 64
  %v974 = vpop.permute.xlu0 %973
  %v976 = vmul.f32 %v969, %v974
  %978 = vrot.lane.b32.xlu0 %v976, 32
  %v979 = vpop.permute.xlu0 %978
  %v981 = vadd.f32 %v971, %v979
  %v982 = vtanh.pop %v981
  %984 = vrot.lane.b32.xlu0 %v982, 64
  %v985 = vpop.permute.xlu0 %984
  %v987 = vmul.f32 %v969, %v985
  %v988 = vpack.c.bf16 %v910, %v910
  %990 = vrot.lane.b32.xlu0 %v988, 32
  %v991 = vpop.permute.xlu0 %990
  %v993 = vsel %vm98, %v991, 0
  %995 = vmatprep.subr.bf16.mxu0 0
  %996 = vmatpush1.bf16.msra.mxu0 %v204
  %997 = vmatprep.subr.bf16.mxu0 0
  %998 = vmatpush1.bf16.msra.mxu0 %v205
  %999 = vmatprep.subr.bf16.mxu0 0
  %1000 = vmatpush1.bf16.msra.mxu0 0
  %1001 = vmatprep.subr.bf16.mxu0 0
  %1002 = vmatpush1.bf16.msra.mxu0 0
  %1003 = vmatprep.subr.bf16.mxu0 0
  %1004 = vmatpush1.bf16.msra.mxu0 0
  %1005 = vmatprep.subr.bf16.mxu0 0
  %1006 = vmatpush1.bf16.msra.mxu0 0
  %1007 = vmatprep.subr.bf16.mxu0 0
  %1008 = vmatpush1.bf16.msra.mxu0 0
  %1009 = vmatprep.subr.bf16.mxu0 0
  %1010 = vmatpush1.bf16.msra.mxu0 0
  %1011 = vmatprep.subr.bf16.mxu0 0
  %1012 = vmatpush1.bf16.msra.mxu0 0
  %1013 = vmatprep.subr.bf16.mxu0 0
  %1014 = vmatpush1.bf16.msra.mxu0 0
  %1015 = vmatprep.subr.bf16.mxu0 0
  %1016 = vmatpush1.bf16.msra.mxu0 0
  %1017 = vmatprep.subr.bf16.mxu0 0
  %1018 = vmatpush1.bf16.msra.mxu0 0
  %1019 = vmatprep.subr.bf16.mxu0 0
  %1020 = vmatpush1.bf16.msra.mxu0 0
  %1021 = vmatprep.subr.bf16.mxu0 0
  %1022 = vmatpush1.bf16.msra.mxu0 0
  %1023 = vmatprep.subr.bf16.mxu0 0
  %1024 = vmatpush1.bf16.msra.mxu0 0
  %1025 = vmatprep.subr.bf16.mxu0 0
  %1026 = vmatpush1.bf16.msra.mxu0 0
  %1027 = vmatprep.mubr.bf16.mxu0 0
  %1028 = vmatmul.mubr.bf16.gmra.mrb[0].mxu0 %v993
  %v1029 = vpop.f32.mrb[0].mxu0
  %v1030 = vadd.f32 0.0, %v1029
  %v1031 = vpop.f32.mrb[0].mxu0
  %v1032 = vpop.f32.mrb[0].mxu0
  %v1033 = vpop.f32.mrb[0].mxu0
  %1034 = vdwg.mxu0
  %v1035 = vadd.f32 %v165, %v1030
  %v1036 = vxor.u32 %v1035, 2147483648
  %v1037 = vmul.f32 %v1036, 1.442695
  %v1038 = vpow.pop %v1037
  %v1039 = vadd.f32 %v1038, 1.0
  %v1040 = vrcp.pop %v1039
  %v1041 = vmul.f32 1.0, %v1040
  %v1042 = vtanh.pop %v1035
  %v1043 = vmul.f32 %v1041, %v904
  %1045 = vrot.lane.b32.xlu0 %v1042, 64
  %v1046 = vpop.permute.xlu0 %1045
  %v1048 = vmul.f32 %v1041, %v1046
  %1050 = vrot.lane.b32.xlu0 %v1048, 32
  %v1051 = vpop.permute.xlu0 %1050
  %v1053 = vadd.f32 %v1043, %v1051
  %v1054 = vtanh.pop %v1053
  %1056 = vrot.lane.b32.xlu0 %v1054, 64
  %v1057 = vpop.permute.xlu0 %1056
  %v1059 = vmul.f32 %v1041, %v1057
  %1061 = vrot.lane.b32.xlu0 %v1059, 32
  %v1062 = vpop.permute.xlu0 %1061
  %1065 = vrot.lane.b32.xlu0 %v987, 64
  %v1066 = vpop.permute.xlu0 %1065
  %v1068 = vsel %vm98, %v1062, %v1066
  %v1069 = vpack.c.bf16 %v1068, %v1068
  %v1071 = vsel %vm320, %v1069, 0
  %1073 = vmatprep.subr.bf16.mxu0 0
  %1074 = vmatpush1.bf16.msra.mxu0 %v312
  %1075 = vmatprep.subr.bf16.mxu0 0
  %1076 = vmatpush1.bf16.msra.mxu0 %v313
  %1077 = vmatprep.subr.bf16.mxu0 0
  %1078 = vmatpush1.bf16.msra.mxu0 %v314
  %1079 = vmatprep.subr.bf16.mxu0 0
  %1080 = vmatpush1.bf16.msra.mxu0 %v315
  %1081 = vmatprep.subr.bf16.mxu0 0
  %1082 = vmatpush1.bf16.msra.mxu0 0
  %1083 = vmatprep.subr.bf16.mxu0 0
  %1084 = vmatpush1.bf16.msra.mxu0 0
  %1085 = vmatprep.subr.bf16.mxu0 0
  %1086 = vmatpush1.bf16.msra.mxu0 0
  %1087 = vmatprep.subr.bf16.mxu0 0
  %1088 = vmatpush1.bf16.msra.mxu0 0
  %1089 = vmatprep.subr.bf16.mxu0 0
  %1090 = vmatpush1.bf16.msra.mxu0 0
  %1091 = vmatprep.subr.bf16.mxu0 0
  %1092 = vmatpush1.bf16.msra.mxu0 0
  %1093 = vmatprep.subr.bf16.mxu0 0
  %1094 = vmatpush1.bf16.msra.mxu0 0
  %1095 = vmatprep.subr.bf16.mxu0 0
  %1096 = vmatpush1.bf16.msra.mxu0 0
  %1097 = vmatprep.subr.bf16.mxu0 0
  %1098 = vmatpush1.bf16.msra.mxu0 0
  %1099 = vmatprep.subr.bf16.mxu0 0
  %1100 = vmatpush1.bf16.msra.mxu0 0
  %1101 = vmatprep.subr.bf16.mxu0 0
  %1102 = vmatpush1.bf16.msra.mxu0 0
  %1103 = vmatprep.subr.bf16.mxu0 0
  %1104 = vmatpush1.bf16.msra.mxu0 0
  %1105 = vmatprep.mubr.bf16.mxu0 0
  %1106 = vmatmul.mubr.bf16.gmra.mrb[0].mxu0 %v1071
  %v1107 = vpop.f32.mrb[0].mxu0
  %v1108 = vadd.f32 %v294, %v1107
  %v1109 = vpop.f32.mrb[0].mxu0
  %v1110 = vpop.f32.mrb[0].mxu0
  %v1111 = vpop.f32.mrb[0].mxu0
  %1112 = vdwg.mxu0
  %v1113 = vxor.u32 %v1108, 2147483648
  %v1114 = vmul.f32 %v1113, 1.442695
  %v1115 = vpow.pop %v1114
  %v1116 = vadd.f32 %v1115, 1.0
  %v1117 = vrcp.pop %v1116
  %v1118 = vmul.f32 1.0, %v1117
  %v1119 = vtanh.pop %v1108
  %v1120 = vmul.f32 %v1118, %v981
  %1122 = vrot.lane.b32.xlu0 %v1119, 64
  %v1123 = vpop.permute.xlu0 %1122
  %v1125 = vmul.f32 %v1118, %v1123
  %1127 = vrot.lane.b32.xlu0 %v1125, 32
  %v1128 = vpop.permute.xlu0 %1127
  %v1130 = vadd.f32 %v1120, %v1128
  %v1131 = vtanh.pop %v1130
  %1133 = vrot.lane.b32.xlu0 %v1131, 64
  %v1134 = vpop.permute.xlu0 %1133
  %v1136 = vmul.f32 %v1118, %v1134
  %v1137 = vpack.c.bf16 %v1059, %v1059
  %1139 = vrot.lane.b32.xlu0 %v1137, 32
  %v1140 = vpop.permute.xlu0 %1139
  %v1142 = vsel %vm98, %v1140, 0
  %1144 = vmatprep.subr.bf16.mxu0 0
  %1145 = vmatpush1.bf16.msra.mxu0 %v204
  %1146 = vmatprep.subr.bf16.mxu0 0
  %1147 = vmatpush1.bf16.msra.mxu0 %v205
  %1148 = vmatprep.subr.bf16.mxu0 0
  %1149 = vmatpush1.bf16.msra.mxu0 0
  %1150 = vmatprep.subr.bf16.mxu0 0
  %1151 = vmatpush1.bf16.msra.mxu0 0
  %1152 = vmatprep.subr.bf16.mxu0 0
  %1153 = vmatpush1.bf16.msra.mxu0 0
  %1154 = vmatprep.subr.bf16.mxu0 0
  %1155 = vmatpush1.bf16.msra.mxu0 0
  %1156 = vmatprep.subr.bf16.mxu0 0
  %1157 = vmatpush1.bf16.msra.mxu0 0
  %1158 = vmatprep.subr.bf16.mxu0 0
  %1159 = vmatpush1.bf16.msra.mxu0 0
  %1160 = vmatprep.subr.bf16.mxu0 0
  %1161 = vmatpush1.bf16.msra.mxu0 0
  %1162 = vmatprep.subr.bf16.mxu0 0
  %1163 = vmatpush1.bf16.msra.mxu0 0
  %1164 = vmatprep.subr.bf16.mxu0 0
  %1165 = vmatpush1.bf16.msra.mxu0 0
  %1166 = vmatprep.subr.bf16.mxu0 0
  %1167 = vmatpush1.bf16.msra.mxu0 0
  %1168 = vmatprep.subr.bf16.mxu0 0
  %1169 = vmatpush1.bf16.msra.mxu0 0
  %1170 = vmatprep.subr.bf16.mxu0 0
  %1171 = vmatpush1.bf16.msra.mxu0 0
  %1172 = vmatprep.subr.bf16.mxu0 0
  %1173 = vmatpush1.bf16.msra.mxu0 0
  %1174 = vmatprep.subr.bf16.mxu0 0
  %1175 = vmatpush1.bf16.msra.mxu0 0
  %1176 = vmatprep.mubr.bf16.mxu0 0
  %1177 = vmatmul.mubr.bf16.gmra.mrb[0].mxu0 %v1142
  %v1178 = vpop.f32.mrb[0].mxu0
  %v1179 = vadd.f32 0.0, %v1178
  %v1180 = vpop.f32.mrb[0].mxu0
  %v1181 = vpop.f32.mrb[0].mxu0
  %v1182 = vpop.f32.mrb[0].mxu0
  %1183 = vdwg.mxu0
  %v1184 = vadd.f32 %v170, %v1179
  %v1185 = vxor.u32 %v1184, 2147483648
  %v1186 = vmul.f32 %v1185, 1.442695
  %v1187 = vpow.pop %v1186
  %v1188 = vadd.f32 %v1187, 1.0
  %v1189 = vrcp.pop %v1188
  %v1190 = vmul.f32 1.0, %v1189
  %v1191 = vtanh.pop %v1184
  %v1192 = vmul.f32 %v1190, %v1053
  %1194 = vrot.lane.b32.xlu0 %v1191, 64
  %v1195 = vpop.permute.xlu0 %1194
  %v1197 = vmul.f32 %v1190, %v1195
  %1199 = vrot.lane.b32.xlu0 %v1197, 32
  %v1200 = vpop.permute.xlu0 %1199
  %v1202 = vadd.f32 %v1192, %v1200
  %v1203 = vtanh.pop %v1202
  %1205 = vrot.lane.b32.xlu0 %v1203, 64
  %v1206 = vpop.permute.xlu0 %1205
  %v1208 = vmul.f32 %v1190, %v1206
  %1210 = vrot.lane.b32.xlu0 %v1208, 32
  %v1211 = vpop.permute.xlu0 %1210
  %1214 = vrot.lane.b32.xlu0 %v1136, 64
  %v1215 = vpop.permute.xlu0 %1214
  %v1217 = vsel %vm98, %v1211, %v1215
  %v1218 = vpack.c.bf16 %v1217, %v1217
  %v1220 = vsel %vm320, %v1218, 0
  %1222 = vmatprep.subr.bf16.mxu0 0
  %1223 = vmatpush1.bf16.msra.mxu0 %v312
  %1224 = vmatprep.subr.bf16.mxu0 0
  %1225 = vmatpush1.bf16.msra.mxu0 %v313
  %1226 = vmatprep.subr.bf16.mxu0 0
  %1227 = vmatpush1.bf16.msra.mxu0 %v314
  %1228 = vmatprep.subr.bf16.mxu0 0
  %1229 = vmatpush1.bf16.msra.mxu0 %v315
  %1230 = vmatprep.subr.bf16.mxu0 0
  %1231 = vmatpush1.bf16.msra.mxu0 0
  %1232 = vmatprep.subr.bf16.mxu0 0
  %1233 = vmatpush1.bf16.msra.mxu0 0
  %1234 = vmatprep.subr.bf16.mxu0 0
  %1235 = vmatpush1.bf16.msra.mxu0 0
  %1236 = vmatprep.subr.bf16.mxu0 0
  %1237 = vmatpush1.bf16.msra.mxu0 0
  %1238 = vmatprep.subr.bf16.mxu0 0
  %1239 = vmatpush1.bf16.msra.mxu0 0
  %1240 = vmatprep.subr.bf16.mxu0 0
  %1241 = vmatpush1.bf16.msra.mxu0 0
  %1242 = vmatprep.subr.bf16.mxu0 0
  %1243 = vmatpush1.bf16.msra.mxu0 0
  %1244 = vmatprep.subr.bf16.mxu0 0
  %1245 = vmatpush1.bf16.msra.mxu0 0
  %1246 = vmatprep.subr.bf16.mxu0 0
  %1247 = vmatpush1.bf16.msra.mxu0 0
  %1248 = vmatprep.subr.bf16.mxu0 0
  %1249 = vmatpush1.bf16.msra.mxu0 0
  %1250 = vmatprep.subr.bf16.mxu0 0
  %1251 = vmatpush1.bf16.msra.mxu0 0
  %1252 = vmatprep.subr.bf16.mxu0 0
  %1253 = vmatpush1.bf16.msra.mxu0 0
  %1254 = vmatprep.mubr.bf16.mxu0 0
  %1255 = vmatmul.mubr.bf16.gmra.mrb[0].mxu0 %v1220
  %v1256 = vpop.f32.mrb[0].mxu0
  %v1257 = vadd.f32 %v294, %v1256
  %v1258 = vpop.f32.mrb[0].mxu0
  %v1259 = vpop.f32.mrb[0].mxu0
  %v1260 = vpop.f32.mrb[0].mxu0
  %1261 = vdwg.mxu0
  %v1262 = vxor.u32 %v1257, 2147483648
  %v1263 = vmul.f32 %v1262, 1.442695
  %v1264 = vpow.pop %v1263
  %v1265 = vadd.f32 %v1264, 1.0
  %v1266 = vrcp.pop %v1265
  %v1267 = vmul.f32 1.0, %v1266
  %v1268 = vtanh.pop %v1257
  %v1269 = vmul.f32 %v1267, %v1130
  %1271 = vrot.lane.b32.xlu0 %v1268, 64
  %v1272 = vpop.permute.xlu0 %1271
  %v1274 = vmul.f32 %v1267, %v1272
  %1276 = vrot.lane.b32.xlu0 %v1274, 32
  %v1277 = vpop.permute.xlu0 %1276
  %v1279 = vadd.f32 %v1269, %v1277
  %v1280 = vtanh.pop %v1279
  %1282 = vrot.lane.b32.xlu0 %v1280, 64
  %v1283 = vpop.permute.xlu0 %1282
  %v1285 = vmul.f32 %v1267, %v1283
  %v1286 = vpack.c.bf16 %v1208, %v1208
  %1288 = vrot.lane.b32.xlu0 %v1286, 32
  %v1289 = vpop.permute.xlu0 %1288
  %v1291 = vsel %vm98, %v1289, 0
  %1293 = vmatprep.subr.bf16.mxu0 0
  %1294 = vmatpush1.bf16.msra.mxu0 %v204
  %1295 = vmatprep.subr.bf16.mxu0 0
  %1296 = vmatpush1.bf16.msra.mxu0 %v205
  %1297 = vmatprep.subr.bf16.mxu0 0
  %1298 = vmatpush1.bf16.msra.mxu0 0
  %1299 = vmatprep.subr.bf16.mxu0 0
  %1300 = vmatpush1.bf16.msra.mxu0 0
  %1301 = vmatprep.subr.bf16.mxu0 0
  %1302 = vmatpush1.bf16.msra.mxu0 0
  %1303 = vmatprep.subr.bf16.mxu0 0
  %1304 = vmatpush1.bf16.msra.mxu0 0
  %1305 = vmatprep.subr.bf16.mxu0 0
  %1306 = vmatpush1.bf16.msra.mxu0 0
  %1307 = vmatprep.subr.bf16.mxu0 0
  %1308 = vmatpush1.bf16.msra.mxu0 0
  %1309 = vmatprep.subr.bf16.mxu0 0
  %1310 = vmatpush1.bf16.msra.mxu0 0
  %1311 = vmatprep.subr.bf16.mxu0 0
  %1312 = vmatpush1.bf16.msra.mxu0 0
  %1313 = vmatprep.subr.bf16.mxu0 0
  %1314 = vmatpush1.bf16.msra.mxu0 0
  %1315 = vmatprep.subr.bf16.mxu0 0
  %1316 = vmatpush1.bf16.msra.mxu0 0
  %1317 = vmatprep.subr.bf16.mxu0 0
  %1318 = vmatpush1.bf16.msra.mxu0 0
  %1319 = vmatprep.subr.bf16.mxu0 0
  %1320 = vmatpush1.bf16.msra.mxu0 0
  %1321 = vmatprep.subr.bf16.mxu0 0
  %1322 = vmatpush1.bf16.msra.mxu0 0
  %1323 = vmatprep.subr.bf16.mxu0 0
  %1324 = vmatpush1.bf16.msra.mxu0 0
  %1325 = vmatprep.mubr.bf16.mxu0 0
  %1326 = vmatmul.mubr.bf16.gmra.mrb[0].mxu0 %v1291
  %v1327 = vpop.f32.mrb[0].mxu0
  %v1328 = vadd.f32 0.0, %v1327
  %v1329 = vpop.f32.mrb[0].mxu0
  %v1330 = vpop.f32.mrb[0].mxu0
  %v1331 = vpop.f32.mrb[0].mxu0
  %1332 = vdwg.mxu0
  %v1333 = vadd.f32 %v173, %v1328
  %v1334 = vxor.u32 %v1333, 2147483648
  %v1335 = vmul.f32 %v1334, 1.442695
  %v1336 = vpow.pop %v1335
  %v1337 = vadd.f32 %v1336, 1.0
  %v1338 = vrcp.pop %v1337
  %v1339 = vmul.f32 1.0, %v1338
  %v1340 = vtanh.pop %v1333
  %v1341 = vmul.f32 %v1339, %v1202
  %1343 = vrot.lane.b32.xlu0 %v1340, 64
  %v1344 = vpop.permute.xlu0 %1343
  %v1346 = vmul.f32 %v1339, %v1344
  %1348 = vrot.lane.b32.xlu0 %v1346, 32
  %v1349 = vpop.permute.xlu0 %1348
  %v1351 = vadd.f32 %v1341, %v1349
  %v1352 = vtanh.pop %v1351
  %1354 = vrot.lane.b32.xlu0 %v1352, 64
  %v1355 = vpop.permute.xlu0 %1354
  %v1357 = vmul.f32 %v1339, %v1355
  %1359 = vrot.lane.b32.xlu0 %v1357, 32
  %v1360 = vpop.permute.xlu0 %1359
  %1363 = vrot.lane.b32.xlu0 %v1285, 64
  %v1364 = vpop.permute.xlu0 %1363
  %v1366 = vsel %vm98, %v1360, %v1364
  %v1367 = vpack.c.bf16 %v1366, %v1366
  %v1369 = vsel %vm320, %v1367, 0
  %1371 = vmatprep.subr.bf16.mxu0 0
  %1372 = vmatpush1.bf16.msra.mxu0 %v312
  %1373 = vmatprep.subr.bf16.mxu0 0
  %1374 = vmatpush1.bf16.msra.mxu0 %v313
  %1375 = vmatprep.subr.bf16.mxu0 0
  %1376 = vmatpush1.bf16.msra.mxu0 %v314
  %1377 = vmatprep.subr.bf16.mxu0 0
  %1378 = vmatpush1.bf16.msra.mxu0 %v315
  %1379 = vmatprep.subr.bf16.mxu0 0
  %1380 = vmatpush1.bf16.msra.mxu0 0
  %1381 = vmatprep.subr.bf16.mxu0 0
  %1382 = vmatpush1.bf16.msra.mxu0 0
  %1383 = vmatprep.subr.bf16.mxu0 0
  %1384 = vmatpush1.bf16.msra.mxu0 0
  %1385 = vmatprep.subr.bf16.mxu0 0
  %1386 = vmatpush1.bf16.msra.mxu0 0
  %1387 = vmatprep.subr.bf16.mxu0 0
  %1388 = vmatpush1.bf16.msra.mxu0 0
  %1389 = vmatprep.subr.bf16.mxu0 0
  %1390 = vmatpush1.bf16.msra.mxu0 0
  %1391 = vmatprep.subr.bf16.mxu0 0
  %1392 = vmatpush1.bf16.msra.mxu0 0
  %1393 = vmatprep.subr.bf16.mxu0 0
  %1394 = vmatpush1.bf16.msra.mxu0 0
  %1395 = vmatprep.subr.bf16.mxu0 0
  %1396 = vmatpush1.bf16.msra.mxu0 0
  %1397 = vmatprep.subr.bf16.mxu0 0
  %1398 = vmatpush1.bf16.msra.mxu0 0
  %1399 = vmatprep.subr.bf16.mxu0 0
  %1400 = vmatpush1.bf16.msra.mxu0 0
  %1401 = vmatprep.subr.bf16.mxu0 0
  %1402 = vmatpush1.bf16.msra.mxu0 0
  %1403 = vmatprep.mubr.bf16.mxu0 0
  %1404 = vmatmul.mubr.bf16.gmra.mrb[0].mxu0 %v1369
  %v1405 = vpop.f32.mrb[0].mxu0
  %v1406 = vadd.f32 %v294, %v1405
  %v1407 = vpop.f32.mrb[0].mxu0
  %v1408 = vpop.f32.mrb[0].mxu0
  %v1409 = vpop.f32.mrb[0].mxu0
  %1410 = vdwg.mxu0
  %v1411 = vxor.u32 %v1406, 2147483648
  %v1412 = vmul.f32 %v1411, 1.442695
  %v1413 = vpow.pop %v1412
  %v1414 = vadd.f32 %v1413, 1.0
  %v1415 = vrcp.pop %v1414
  %v1416 = vmul.f32 1.0, %v1415
  %v1417 = vtanh.pop %v1406
  %v1418 = vmul.f32 %v1416, %v1279
  %1420 = vrot.lane.b32.xlu0 %v1417, 64
  %v1421 = vpop.permute.xlu0 %1420
  %v1423 = vmul.f32 %v1416, %v1421
  %1425 = vrot.lane.b32.xlu0 %v1423, 32
  %v1426 = vpop.permute.xlu0 %1425
  %v1428 = vadd.f32 %v1418, %v1426
  %v1429 = vtanh.pop %v1428
  %1431 = vrot.lane.b32.xlu0 %v1429, 64
  %v1432 = vpop.permute.xlu0 %1431
  %v1434 = vmul.f32 %v1416, %v1432
  %v1435 = vld [vmem:[%s8] sm:$0x1]
  %v1437 = vlaneseq
  %v1438 = vshrl.u32 %v1437, 7
  %v1439 = vsub.s32 0, %v1438
  %v1440 = vrot.slane %v1435, %v1439
  %1441 = vrot.lane.b32.xlu0 %v1440, 96
  %v1442 = vpop.permute.xlu0 %1441
  %v1444 = vmul.f32 %v1434, %v1442
  %1446 = vrot.lane.b32.xlu0 %v1444, 32
  %v1447 = vpop.permute.xlu0 %1446
  %v1449 = vsel %vm98, %v1447, 0.0
  %1450 = vadd.xlane.f32.xlu0 %v1449
  %v1451 = vpop.xlane.xlu0 %1450
  %s1452 = sld [smem:[#allocation2]]
  %v1453 = vstv %s1452
  %v1454 = vadd.f32 %v1451, %v1453
  %1456 = vrot.lane.b32.xlu0 %v1434, 96
  %v1457 = vpop.permute.xlu0 %1456
  %1460 = vrot.lane.b32.xlu0 %v1428, 64
  %v1461 = vpop.permute.xlu0 %1460
  %v1463 = vsel %vm98, %v1360, %v1351
  %v1464 = vsel %vm320, %v1463, %v1457
  %vm1465 = vcmask 785408
  %v1466 = vsel %vm1465, %v1464, %v1461
  %1467 = vst [vmem:[%s11] sm:$0xff] %v1466
  %v1468 = vxor.u32 %v1454, 2147483648
  %v1469 = vmul.f32 %v1468, 1.442695
  %v1470 = vpow.pop %v1469
  %v1471 = vadd.f32 %v1470, 1.0
  %v1472 = vrcp.pop %v1471
  %v1473 = vmul.f32 1.0, %v1472
  %vm1474 = vcmask 7168
  %1475 = vst.msk [vmem:[%s10] sm:$0xff] %vm1474, %v1473
  // Predicated region
  $region42: #{forward.1} parent=0 // pred_check
    _
  $region43: #{forward.1} parent=0 // pred_check_branch
    %1477 = sbr.rel (0) target = $region45
  $region44: #{forward.1} parent=0 // pred_region
    _
  $region45: #{forward.1} parent=0 // pred_fallthru
    _
  // Predicated region
  $region46: #{forward.1} parent=0 // pred_check
    _
  $region47: #{forward.1} parent=0 // pred_check_branch
    %1479 = sbr.rel (0) target = $region49
  $region48: #{forward.1} parent=0 // pred_region
    _
  $region49: #{forward.1} parent=0 // pred_fallthru
    _
  // Predicated region
  $region50: #{forward.1} parent=0 // pred_check
    _
  $region51: #{forward.1} parent=0 // pred_check_branch
    %1481 = sbr.rel (0) target = $region53
  $region52: #{forward.1} parent=0 // pred_region
    _
  $region53: #{forward.1} parent=0 // pred_fallthru
    _
  // Predicated region
  $region54: #{forward.1} parent=0 // pred_check
    _
  $region55: #{forward.1} parent=0 // pred_check_branch
    %1483 = sbr.rel (0) target = $region57
  $region56: #{forward.1} parent=0 // pred_region
    _
  $region57: #{forward.1} parent=0 // pred_fallthru
    _

</llo_original>
